<compile_context>
chip_gen: v6e
topology: v6e:2x2x1
jax: 0.10.0
libtpu: 0.0.40
codegen_flags: <defaults>
</compile_context>

<pallas_src>
import functools

import jax
import jax.numpy as jnp
import numpy as np
from jax.experimental import pallas as pl
from jax.experimental.pallas import tpu as pltpu


# ----------------------------------------------------------------------------
# Fused kernel: one grid step = one image, everything stays VMEM-resident.
# Activation layout: (H*W, C)  (row = h*W + w, lanes = channels).
# ----------------------------------------------------------------------------
def _fused_kernel(x_ref, w1_ref, hidp_ref, dwt_ref, w3_ref, outp_ref, band_ref,
                  o_ref, *, H, W, C_hid, C_out, use_res, inv_hw):
    HW = H * W
    xf = x_ref[0].astype(jnp.float32)                        # (HW, Cin) f32

    # ---- 1) expand 1x1 conv (bf16 MXU, f32 acc) + BN + ReLU6 ----
    h1 = jnp.dot(xf.astype(jnp.bfloat16), w1_ref[...],
                 preferred_element_type=jnp.float32)          # (HW, C_hid)
    s1 = hidp_ref[0:1, :]
    b1 = hidp_ref[1:2, :]
    s2 = hidp_ref[2:3, :]
    b2 = hidp_ref[3:4, :]
    h1 = jnp.clip(h1 * s1 + b1, 0.0, 6.0)

    # ---- edge masks, computed ONCE and reused across the taps ----
    row = jax.lax.broadcasted_iota(jnp.int32, (HW, C_hid), 0)
    col = row % W
    w_ok = {-1: col >= 1, 1: col <= W - 2}                    # valid w neighbour
    h_ok = {-1: row >= W, 1: row < HW - W}                    # valid h neighbour

    # ---- 2) 3x3 depthwise conv (stride=1, pad=1) + BN + ReLU6 ----
    dwt = dwt_ref[...]                                        # (9, C_hid)

    # w-shifted copies (+/-1 row in this layout): 2 rolls + 2 masked selects.
    sh = {0: h1}
    for d in (-1, 1):
        v = pltpu.roll(h1, shift=(-d) % HW, axis=0)
        sh[d] = jnp.where(w_ok[d], v, 0.0)

    # Per-kernel-row partial sums first; the per-channel tap weights commute with the
    # h-roll, so only 2 more rolls + 2 masked selects are needed (4 rolls total).
    acc = jnp.zeros((HW, C_hid), jnp.float32)
    for r in (-1, 0, 1):
        base = (r + 1) * 3
        part = (sh[-1] * dwt[base + 0:base + 1, :]
                + sh[0] * dwt[base + 1:base + 2, :]
                + sh[1] * dwt[base + 2:base + 3, :])
        if r != 0:
            part = pltpu.roll(part, shift=(-r * W) % HW, axis=0)
            part = jnp.where(h_ok[r], part, 0.0)
        acc = acc + part
    acc = jnp.clip(acc * s2 + b2, 0.0, 6.0)

    # ---- 3) project 1x1 conv (bf16 MXU, f32 acc) + BN (linear bottleneck) ----
    y = jnp.dot(acc.astype(jnp.bfloat16), w3_ref[...],
                preferred_element_type=jnp.float32)           # (HW, C_out)
    y = y * outp_ref[0:1, :] + outp_ref[1:2, :]

    # ---- 4) ECA: global avg pool -> banded k=3 channel conv -> sigmoid -> rescale ----
    pool = jnp.sum(y, axis=0, keepdims=True) * inv_hw         # (1, C_out)
    att = jax.nn.sigmoid(jnp.dot(pool, band_ref[...],
                                 preferred_element_type=jnp.float32))
    out = y * att
    if use_res:
        out = out + xf                                        # requires Cin == C_out
    o_ref[0] = out.astype(o_ref.dtype)


# ----------------------------------------------------------------------------
# One-time parameter pack (hoisted out of the forward path).
# ----------------------------------------------------------------------------
def prepare_params(p):
    hidden = p["w1"].shape[1]
    cout = p["w3"].shape[1]
    f32 = jnp.float32
    ew = p["eca_w"].astype(f32)
    # Banded matrix so att_logits = pool @ band reproduces Conv1d(k=3, pad=1, no bias).
    band = (ew[0] * jnp.eye(cout, k=1, dtype=f32)
            + ew[1] * jnp.eye(cout, k=0, dtype=f32)
            + ew[2] * jnp.eye(cout, k=-1, dtype=f32))
    return dict(
        w1=p["w1"].astype(jnp.bfloat16),                      # (Cin,   C_hid)
        w3=p["w3"].astype(jnp.bfloat16),                      # (C_hid, C_out)
        hidp=jnp.concatenate([p["s1"], p["b1"], p["s2"], p["b2"]], axis=0).astype(f32),
        outp=jnp.concatenate([p["s3"], p["b3"]], axis=0).astype(f32),
        dwt=p["dw"].reshape(9, hidden).astype(f32),           # (9, C_hid)
        band=band,                                            # (C_out, C_out)
    )


# ----------------------------------------------------------------------------
# Forward wrapper: reshape to the (H*W, C) layout and launch the fused kernel.
# ----------------------------------------------------------------------------
def eca_inverted_residual_v2(x, pack, *, use_res_connect):
    n, h, w, cin = x.shape
    hidden = pack["w1"].shape[1]
    cout = pack["w3"].shape[1]
    if use_res_connect:
        assert cin == cout
    hw = h * w
    assert hw % 8 == 0, "H*W should be a multiple of 8 for clean sublane tiling"

    xl = x.reshape(n, hw, cin)                                # row-major (h, w) -> rows

    kernel = functools.partial(_fused_kernel, H=h, W=w, C_hid=hidden, C_out=cout,
                               use_res=use_res_connect, inv_hw=1.0 / float(hw))

    def const(shape):
        r = len(shape)
        return pl.BlockSpec(shape, lambda i, _r=r: (0,) * _r)

    # NOTE: the grid-invariant operands total only a few KB now, so the default
    # double-buffering cost is negligible (no pipeline_mode tuning required).
    out = pl.pallas_call(
        kernel,
        out_shape=jax.ShapeDtypeStruct((n, hw, cout), x.dtype),
        grid=(n,),
        in_specs=[
            pl.BlockSpec((1, hw, cin), lambda i: (i, 0, 0)),
            const((cin, hidden)),
            const((4, hidden)),
            const((9, hidden)),
            const((hidden, cout)),
            const((2, cout)),
            const((cout, cout)),
        ],
        out_specs=pl.BlockSpec((1, hw, cout), lambda i: (i, 0, 0)),
        compiler_params=pltpu.CompilerParams(dimension_semantics=("parallel",)),
    )(xl, pack["w1"], pack["hidp"], pack["dwt"], pack["w3"], pack["outp"],
      pack["band"])
    return out.reshape(n, h, w, cout)


# ----------------------------------------------------------------------------
# Deterministic synthetic parameters (eval-mode BN folded to scale/bias)
# ----------------------------------------------------------------------------
def _fold_bn(gamma, beta, mean, var, eps=1e-5):
    scale = gamma / jnp.sqrt(var + eps)
    bias = beta - mean * scale
    return scale[None, :], bias[None, :]


def init_params(key, inp, oup, expand_ratio):
    hidden = int(round(inp * expand_ratio))
    ks = jax.random.split(key, 16)
    f32 = jnp.float32

    w1 = 0.2 * jax.random.normal(ks[0], (inp, hidden), f32)          # 1x1 expand
    dw = 0.2 * jax.random.normal(ks[1], (3, 3, hidden), f32)         # depthwise 3x3
    w3 = 0.2 * jax.random.normal(ks[2], (hidden, oup), f32)          # 1x1 project

    def bn(kg, kb, km, kv, c):
        gamma = jax.random.uniform(kg, (c,), f32, 0.5, 1.5)
        beta = 0.1 * jax.random.normal(kb, (c,), f32)
        mean = 0.1 * jax.random.normal(km, (c,), f32)
        var = jax.random.uniform(kv, (c,), f32, 0.5, 1.5)
        return _fold_bn(gamma, beta, mean, var)

    s1, b1 = bn(ks[3], ks[4], ks[5], ks[6], hidden)
    s2, b2 = bn(ks[7], ks[8], ks[9], ks[10], hidden)
    s3, b3 = bn(ks[11], ks[12], ks[13], ks[14], oup)

    # ECA: nn.Conv1d(1, 1, k=3, padding=1, bias=False) over channels — raw 3 taps.
    eca_w = 0.5 * jax.random.normal(ks[15], (3,), f32)

    return dict(w1=w1, s1=s1, b1=b1, dw=dw, s2=s2, b2=b2,
                w3=w3, s3=s3, b3=b3, eca_w=eca_w)


# ----------------------------------------------------------------------------
# Pure-JAX reference (NHWC, f32) for correctness
# ----------------------------------------------------------------------------
def reference_forward(x, p, *, use_res_connect):
    hi = jnp.einsum("nhwc,cd->nhwd", x, p["w1"]) * p["s1"] + p["b1"]
    hi = jnp.clip(hi, 0.0, 6.0)
    n, h, w, _ = x.shape
    hp = jnp.pad(hi, ((0, 0), (1, 1), (1, 1), (0, 0)))
    acc = jnp.zeros_like(hi)
    for di in range(3):
        for dj in range(3):
            acc = acc + hp[:, di:di + h, dj:dj + w, :] * p["dw"][di, dj]
    acc = jnp.clip(acc * p["s2"] + p["b2"], 0.0, 6.0)
    y = jnp.einsum("nhwc,cd->nhwd", acc, p["w3"]) * p["s3"] + p["b3"]
    pool = y.mean(axis=(1, 2))                             # (N, C)
    pp = jnp.pad(pool, ((0, 0), (1, 1)))                   # zero-padded Conv1d(k=3)
    ew = p["eca_w"]
    att = jax.nn.sigmoid(ew[0] * pp[:, :-2] + ew[1] * pp[:, 1:-1] + ew[2] * pp[:, 2:])
    out = y * att[:, None, None, :]
    if use_res_connect:
        out = out + x
    return out


if __name__ == "__main__":
    # Module instantiation: ECAInvertedResidualv2(inp=16, oup=16, stride=1, expand_ratio=2)
    N, H, W = 2, 16, 16
    inp = oup = 16
    expand_ratio = 2
    stride = 1
    use_res_connect = (stride == 1 and inp == oup)

    key = jax.random.PRNGKey(0)
    kx, kp = jax.random.split(key)
    x = jax.random.normal(kx, (N, H, W, inp), jnp.float32)   # NHWC input
    params = init_params(kp, inp, oup, expand_ratio)
    pack = prepare_params(params)                            # one-time, hoisted

    fwd = jax.jit(functools.partial(eca_inverted_residual_v2,
                                    use_res_connect=use_res_connect))
    out = jax.block_until_ready(fwd(x, pack))

    ref = jax.block_until_ready(
        reference_forward(x, params, use_res_connect=use_res_connect))
    # bf16 MXU operands -> ~1e-2-level deviation vs. the pure-f32 reference.
    np.testing.assert_allclose(np.asarray(out), np.asarray(ref), rtol=2e-2, atol=2e-2)

    print("KERNEL_OK")
</pallas_src>

<mosaic_0001>
module attributes {stable_mosaic.version = 11 : i64} {
  func.func @_fused_kernel(%arg0: i32, %arg1: memref<1x256x16xf32, #tpu.memory_space<vmem>>, %arg2: memref<16x32xbf16, #tpu.memory_space<vmem>>, %arg3: memref<4x32xf32, #tpu.memory_space<vmem>>, %arg4: memref<9x32xf32, #tpu.memory_space<vmem>>, %arg5: memref<32x16xbf16, #tpu.memory_space<vmem>>, %arg6: memref<2x16xf32, #tpu.memory_space<vmem>>, %arg7: memref<16x16xf32, #tpu.memory_space<vmem>>, %arg8: memref<1x256x16xf32, #tpu.memory_space<vmem>>) attributes {dimension_semantics = [#tpu.dimension_semantics<parallel>], iteration_bounds = array<i64: 2>, scalar_prefetch = 0 : i64, scratch_operands = 0 : i64, tpu.core_type = #tpu.core_type<tc>, window_params = [{transform_indices = @transform_0, window_bounds = array<i64: 1, 256, 16>}, {pipeline_mode = #tpu.pipeline_mode<synchronous>, transform_indices = @transform_1, window_bounds = array<i64: 16, 32>}, {pipeline_mode = #tpu.pipeline_mode<synchronous>, transform_indices = @transform_2, window_bounds = array<i64: 4, 32>}, {pipeline_mode = #tpu.pipeline_mode<synchronous>, transform_indices = @transform_3, window_bounds = array<i64: 9, 32>}, {pipeline_mode = #tpu.pipeline_mode<synchronous>, transform_indices = @transform_4, window_bounds = array<i64: 32, 16>}, {pipeline_mode = #tpu.pipeline_mode<synchronous>, transform_indices = @transform_5, window_bounds = array<i64: 2, 16>}, {pipeline_mode = #tpu.pipeline_mode<synchronous>, transform_indices = @transform_6, window_bounds = array<i64: 16, 16>}, {transform_indices = @transform_7, window_bounds = array<i64: 1, 256, 16>}]} {
    %c0 = arith.constant 0 : index
    %c0_0 = arith.constant 0 : index
    %c0_1 = arith.constant 0 : index
    %0 = vector.load %arg1[%c0, %c0_0, %c0_1] : memref<1x256x16xf32, #tpu.memory_space<vmem>>, vector<1x256x16xf32>
    %1 = vector.shape_cast %0 : vector<1x256x16xf32> to vector<256x16xf32>
    %2 = arith.truncf %1 : vector<256x16xf32> to vector<256x16xbf16>
    %c0_2 = arith.constant 0 : index
    %c0_3 = arith.constant 0 : index
    %3 = vector.load %arg2[%c0_2, %c0_3] : memref<16x32xbf16, #tpu.memory_space<vmem>>, vector<16x32xbf16>
    %cst = arith.constant dense<0.000000e+00> : vector<256x32xf32>
    %4 = tpu.matmul %2, %3, %cst {dimension_numbers = #tpu.dot_dimension_numbers<[1], [0], [0], [1], [0, 0, 1, 1], [], []>} : vector<256x16xbf16>, vector<16x32xbf16>, vector<256x32xf32> -> vector<256x32xf32>
    %c0_4 = arith.constant 0 : index
    %c0_5 = arith.constant 0 : index
    %5 = vector.load %arg3[%c0_4, %c0_5] : memref<4x32xf32, #tpu.memory_space<vmem>>, vector<1x32xf32>
    %c1 = arith.constant 1 : index
    %c0_6 = arith.constant 0 : index
    %6 = vector.load %arg3[%c1, %c0_6] : memref<4x32xf32, #tpu.memory_space<vmem>>, vector<1x32xf32>
    %c2 = arith.constant 2 : index
    %c0_7 = arith.constant 0 : index
    %7 = vector.load %arg3[%c2, %c0_7] : memref<4x32xf32, #tpu.memory_space<vmem>>, vector<1x32xf32>
    %c3 = arith.constant 3 : index
    %c0_8 = arith.constant 0 : index
    %8 = vector.load %arg3[%c3, %c0_8] : memref<4x32xf32, #tpu.memory_space<vmem>>, vector<1x32xf32>
    %9 = vector.broadcast %5 : vector<1x32xf32> to vector<256x32xf32>
    %10 = arith.mulf %4, %9 : vector<256x32xf32>
    %11 = vector.broadcast %6 : vector<1x32xf32> to vector<256x32xf32>
    %12 = arith.addf %10, %11 : vector<256x32xf32>
    %cst_9 = arith.constant 0.000000e+00 : f32
    %cst_10 = arith.constant 6.000000e+00 : f32
    %13 = vector.broadcast %cst_9 : f32 to vector<256x32xf32>
    %14 = arith.maximumf %13, %12 : vector<256x32xf32>
    %15 = vector.broadcast %cst_10 : f32 to vector<256x32xf32>
    %16 = arith.minimumf %15, %14 : vector<256x32xf32>
    %17 = tpu.iota {dimensions = array<i32: 0>} : vector<256x32xi32>
    %c16_i32 = arith.constant 16 : i32
    %c0_i32 = arith.constant 0 : i32
    %18 = arith.cmpi eq, %c16_i32, %c0_i32 : i32
    %c1_i32 = arith.constant 1 : i32
    %19 = arith.select %18, %c1_i32, %c16_i32 : i32
    %20 = vector.broadcast %19 : i32 to vector<256x32xi32>
    %21 = arith.remsi %17, %20 : vector<256x32xi32>
    %c0_i32_11 = arith.constant 0 : i32
    %22 = vector.broadcast %c0_i32_11 : i32 to vector<256x32xi32>
    %23 = arith.cmpi ne, %21, %22 : vector<256x32xi32>
    %c0_i32_12 = arith.constant 0 : i32
    %24 = vector.broadcast %c0_i32_12 : i32 to vector<256x32xi32>
    %25 = arith.cmpi slt, %21, %24 : vector<256x32xi32>
    %c0_i32_13 = arith.constant 0 : i32
    %26 = arith.cmpi slt, %19, %c0_i32_13 : i32
    %27 = vector.broadcast %26 : i1 to vector<256x32xi1>
    %28 = vector.broadcast %27 : vector<256x32xi1> to vector<256x32xi1>
    %29 = arith.xori %25, %28 : vector<256x32xi1>
    %30 = arith.andi %29, %23 : vector<256x32xi1>
    %31 = vector.broadcast %19 : i32 to vector<256x32xi32>
    %32 = arith.addi %21, %31 : vector<256x32xi32>
    %33 = arith.select %30, %32, %21 : vector<256x32xi1>, vector<256x32xi32>
    %c1_i32_14 = arith.constant 1 : i32
    %34 = vector.broadcast %c1_i32_14 : i32 to vector<256x32xi32>
    %35 = arith.cmpi sge, %33, %34 : vector<256x32xi32>
    %c14_i32 = arith.constant 14 : i32
    %36 = vector.broadcast %c14_i32 : i32 to vector<256x32xi32>
    %37 = arith.cmpi sle, %33, %36 : vector<256x32xi32>
    %c16_i32_15 = arith.constant 16 : i32
    %38 = vector.broadcast %c16_i32_15 : i32 to vector<256x32xi32>
    %39 = arith.cmpi sge, %17, %38 : vector<256x32xi32>
    %c240_i32 = arith.constant 240 : i32
    %40 = vector.broadcast %c240_i32 : i32 to vector<256x32xi32>
    %41 = arith.cmpi slt, %17, %40 : vector<256x32xi32>
    %c0_16 = arith.constant 0 : index
    %c0_17 = arith.constant 0 : index
    %42 = vector.load %arg4[%c0_16, %c0_17] : memref<9x32xf32, #tpu.memory_space<vmem>>, vector<9x32xf32>
    %c1_i32_18 = arith.constant 1 : i32
    %43 = tpu.dynamic_rotate %16 by %c1_i32_18 dim 0 : vector<256x32xf32>, i32 -> vector<256x32xf32>
    %cst_19 = arith.constant 0.000000e+00 : f32
    %44 = vector.broadcast %cst_19 : f32 to vector<256x32xf32>
    %45 = arith.select %35, %43, %44 : vector<256x32xi1>, vector<256x32xf32>
    %c255_i32 = arith.constant 255 : i32
    %46 = tpu.dynamic_rotate %16 by %c255_i32 dim 0 : vector<256x32xf32>, i32 -> vector<256x32xf32>
    %cst_20 = arith.constant 0.000000e+00 : f32
    %47 = vector.broadcast %cst_20 : f32 to vector<256x32xf32>
    %48 = arith.select %37, %46, %47 : vector<256x32xi1>, vector<256x32xf32>
    %cst_21 = arith.constant 0.000000e+00 : f32
    %49 = vector.broadcast %cst_21 : f32 to vector<256x32xf32>
    %50 = vector.extract_strided_slice %42 {offsets = [0, 0], sizes = [1, 32], strides = [1, 1]} : vector<9x32xf32> to vector<1x32xf32>
    %51 = vector.broadcast %50 : vector<1x32xf32> to vector<256x32xf32>
    %52 = arith.mulf %45, %51 : vector<256x32xf32>
    %53 = vector.extract_strided_slice %42 {offsets = [1, 0], sizes = [1, 32], strides = [1, 1]} : vector<9x32xf32> to vector<1x32xf32>
    %54 = vector.broadcast %53 : vector<1x32xf32> to vector<256x32xf32>
    %55 = arith.mulf %16, %54 : vector<256x32xf32>
    %56 = arith.addf %52, %55 : vector<256x32xf32>
    %57 = vector.extract_strided_slice %42 {offsets = [2, 0], sizes = [1, 32], strides = [1, 1]} : vector<9x32xf32> to vector<1x32xf32>
    %58 = vector.broadcast %57 : vector<1x32xf32> to vector<256x32xf32>
    %59 = arith.mulf %48, %58 : vector<256x32xf32>
    %60 = arith.addf %56, %59 : vector<256x32xf32>
    %c16_i32_22 = arith.constant 16 : i32
    %61 = tpu.dynamic_rotate %60 by %c16_i32_22 dim 0 : vector<256x32xf32>, i32 -> vector<256x32xf32>
    %cst_23 = arith.constant 0.000000e+00 : f32
    %62 = vector.broadcast %cst_23 : f32 to vector<256x32xf32>
    %63 = arith.select %39, %61, %62 : vector<256x32xi1>, vector<256x32xf32>
    %64 = arith.addf %49, %63 : vector<256x32xf32>
    %65 = vector.extract_strided_slice %42 {offsets = [3, 0], sizes = [1, 32], strides = [1, 1]} : vector<9x32xf32> to vector<1x32xf32>
    %66 = vector.broadcast %65 : vector<1x32xf32> to vector<256x32xf32>
    %67 = arith.mulf %45, %66 : vector<256x32xf32>
    %68 = vector.extract_strided_slice %42 {offsets = [4, 0], sizes = [1, 32], strides = [1, 1]} : vector<9x32xf32> to vector<1x32xf32>
    %69 = vector.broadcast %68 : vector<1x32xf32> to vector<256x32xf32>
    %70 = arith.mulf %16, %69 : vector<256x32xf32>
    %71 = arith.addf %67, %70 : vector<256x32xf32>
    %72 = vector.extract_strided_slice %42 {offsets = [5, 0], sizes = [1, 32], strides = [1, 1]} : vector<9x32xf32> to vector<1x32xf32>
    %73 = vector.broadcast %72 : vector<1x32xf32> to vector<256x32xf32>
    %74 = arith.mulf %48, %73 : vector<256x32xf32>
    %75 = arith.addf %71, %74 : vector<256x32xf32>
    %76 = arith.addf %64, %75 : vector<256x32xf32>
    %77 = vector.extract_strided_slice %42 {offsets = [6, 0], sizes = [1, 32], strides = [1, 1]} : vector<9x32xf32> to vector<1x32xf32>
    %78 = vector.broadcast %77 : vector<1x32xf32> to vector<256x32xf32>
    %79 = arith.mulf %45, %78 : vector<256x32xf32>
    %80 = vector.extract_strided_slice %42 {offsets = [7, 0], sizes = [1, 32], strides = [1, 1]} : vector<9x32xf32> to vector<1x32xf32>
    %81 = vector.broadcast %80 : vector<1x32xf32> to vector<256x32xf32>
    %82 = arith.mulf %16, %81 : vector<256x32xf32>
    %83 = arith.addf %79, %82 : vector<256x32xf32>
    %84 = vector.extract_strided_slice %42 {offsets = [8, 0], sizes = [1, 32], strides = [1, 1]} : vector<9x32xf32> to vector<1x32xf32>
    %85 = vector.broadcast %84 : vector<1x32xf32> to vector<256x32xf32>
    %86 = arith.mulf %48, %85 : vector<256x32xf32>
    %87 = arith.addf %83, %86 : vector<256x32xf32>
    %c240_i32_24 = arith.constant 240 : i32
    %88 = tpu.dynamic_rotate %87 by %c240_i32_24 dim 0 : vector<256x32xf32>, i32 -> vector<256x32xf32>
    %cst_25 = arith.constant 0.000000e+00 : f32
    %89 = vector.broadcast %cst_25 : f32 to vector<256x32xf32>
    %90 = arith.select %41, %88, %89 : vector<256x32xi1>, vector<256x32xf32>
    %91 = arith.addf %76, %90 : vector<256x32xf32>
    %92 = vector.broadcast %7 : vector<1x32xf32> to vector<256x32xf32>
    %93 = arith.mulf %91, %92 : vector<256x32xf32>
    %94 = vector.broadcast %8 : vector<1x32xf32> to vector<256x32xf32>
    %95 = arith.addf %93, %94 : vector<256x32xf32>
    %cst_26 = arith.constant 0.000000e+00 : f32
    %cst_27 = arith.constant 6.000000e+00 : f32
    %96 = vector.broadcast %cst_26 : f32 to vector<256x32xf32>
    %97 = arith.maximumf %96, %95 : vector<256x32xf32>
    %98 = vector.broadcast %cst_27 : f32 to vector<256x32xf32>
    %99 = arith.minimumf %98, %97 : vector<256x32xf32>
    %100 = arith.truncf %99 : vector<256x32xf32> to vector<256x32xbf16>
    %c0_28 = arith.constant 0 : index
    %c0_29 = arith.constant 0 : index
    %101 = vector.load %arg5[%c0_28, %c0_29] : memref<32x16xbf16, #tpu.memory_space<vmem>>, vector<32x16xbf16>
    %cst_30 = arith.constant dense<0.000000e+00> : vector<256x16xf32>
    %102 = tpu.matmul %100, %101, %cst_30 {dimension_numbers = #tpu.dot_dimension_numbers<[1], [0], [0], [1], [0, 0, 1, 1], [], []>} : vector<256x32xbf16>, vector<32x16xbf16>, vector<256x16xf32> -> vector<256x16xf32>
    %c0_31 = arith.constant 0 : index
    %c0_32 = arith.constant 0 : index
    %103 = vector.load %arg6[%c0_31, %c0_32] : memref<2x16xf32, #tpu.memory_space<vmem>>, vector<1x16xf32>
    %104 = vector.broadcast %103 : vector<1x16xf32> to vector<256x16xf32>
    %105 = arith.mulf %102, %104 : vector<256x16xf32>
    %c1_33 = arith.constant 1 : index
    %c0_34 = arith.constant 0 : index
    %106 = vector.load %arg6[%c1_33, %c0_34] : memref<2x16xf32, #tpu.memory_space<vmem>>, vector<1x16xf32>
    %107 = vector.broadcast %106 : vector<1x16xf32> to vector<256x16xf32>
    %108 = arith.addf %105, %107 : vector<256x16xf32>
    %cst_35 = arith.constant dense<0.000000e+00> : vector<16xf32>
    %109 = vector.multi_reduction <add>, %108, %cst_35 [0] : vector<256x16xf32> to vector<16xf32>
    %110 = vector.shape_cast %109 : vector<16xf32> to vector<1x16xf32>
    %cst_36 = arith.constant 3.906250e-03 : f32
    %111 = vector.broadcast %cst_36 : f32 to vector<1x16xf32>
    %112 = arith.mulf %110, %111 : vector<1x16xf32>
    %c0_37 = arith.constant 0 : index
    %c0_38 = arith.constant 0 : index
    %113 = vector.load %arg7[%c0_37, %c0_38] : memref<16x16xf32, #tpu.memory_space<vmem>>, vector<16x16xf32>
    %cst_39 = arith.constant dense<0.000000e+00> : vector<1x16xf32>
    %114 = tpu.matmul %112, %113, %cst_39 {dimension_numbers = #tpu.dot_dimension_numbers<[1], [0], [0], [1], [0, 0, 1, 1], [], []>} : vector<1x16xf32>, vector<16x16xf32>, vector<1x16xf32> -> vector<1x16xf32>
    %115 = arith.negf %114 : vector<1x16xf32>
    %116 = math.exp %115 : vector<1x16xf32>
    %cst_40 = arith.constant 1.000000e+00 : f32
    %117 = vector.broadcast %cst_40 : f32 to vector<1x16xf32>
    %118 = arith.addf %117, %116 : vector<1x16xf32>
    %119 = arith.divf %117, %118 : vector<1x16xf32>
    %120 = vector.broadcast %119 : vector<1x16xf32> to vector<256x16xf32>
    %121 = arith.mulf %108, %120 : vector<256x16xf32>
    %122 = arith.addf %121, %1 : vector<256x16xf32>
    %c0_41 = arith.constant 0 : index
    %c0_42 = arith.constant 0 : index
    %c0_43 = arith.constant 0 : index
    %123 = vector.load %arg8[%c0_41, %c0_42, %c0_43] : memref<1x256x16xf32, #tpu.memory_space<vmem>>, vector<1x256x16xf32>
    %124 = vector.shape_cast %123 : vector<1x256x16xf32> to vector<256x16xf32>
    %125 = vector.shape_cast %122 : vector<256x16xf32> to vector<1x256x16xf32>
    tpu.vector_store %arg8[%c0_41, %c0_42, %c0_43], %125 {strides = array<i32>} : memref<1x256x16xf32, #tpu.memory_space<vmem>>, vector<1x256x16xf32>,
    return
  }
  func.func @transform_0(%arg0: i32) -> (i32, i32, i32) {
    %c0_i32 = arith.constant 0 : i32
    %c0_i32_0 = arith.constant 0 : i32
    %c0_i32_1 = arith.constant 0 : i32
    return %arg0, %c0_i32, %c0_i32_0 : i32, i32, i32
  }
  func.func @transform_1(%arg0: i32) -> (i32, i32) {
    %c0_i32 = arith.constant 0 : i32
    %c0_i32_0 = arith.constant 0 : i32
    %c0_i32_1 = arith.constant 0 : i32
    return %c0_i32, %c0_i32_0 : i32, i32
  }
  func.func @transform_2(%arg0: i32) -> (i32, i32) {
    %c0_i32 = arith.constant 0 : i32
    %c0_i32_0 = arith.constant 0 : i32
    %c0_i32_1 = arith.constant 0 : i32
    return %c0_i32, %c0_i32_0 : i32, i32
  }
  func.func @transform_3(%arg0: i32) -> (i32, i32) {
    %c0_i32 = arith.constant 0 : i32
    %c0_i32_0 = arith.constant 0 : i32
    %c0_i32_1 = arith.constant 0 : i32
    return %c0_i32, %c0_i32_0 : i32, i32
  }
  func.func @transform_4(%arg0: i32) -> (i32, i32) {
    %c0_i32 = arith.constant 0 : i32
    %c0_i32_0 = arith.constant 0 : i32
    %c0_i32_1 = arith.constant 0 : i32
    return %c0_i32, %c0_i32_0 : i32, i32
  }
  func.func @transform_5(%arg0: i32) -> (i32, i32) {
    %c0_i32 = arith.constant 0 : i32
    %c0_i32_0 = arith.constant 0 : i32
    %c0_i32_1 = arith.constant 0 : i32
    return %c0_i32, %c0_i32_0 : i32, i32
  }
  func.func @transform_6(%arg0: i32) -> (i32, i32) {
    %c0_i32 = arith.constant 0 : i32
    %c0_i32_0 = arith.constant 0 : i32
    %c0_i32_1 = arith.constant 0 : i32
    return %c0_i32, %c0_i32_0 : i32, i32
  }
  func.func @transform_7(%arg0: i32) -> (i32, i32, i32) {
    %c0_i32 = arith.constant 0 : i32
    %c0_i32_0 = arith.constant 0 : i32
    %c0_i32_1 = arith.constant 0 : i32
    return %arg0, %c0_i32, %c0_i32_0 : i32, i32, i32
  }
}

</mosaic_0001>

<llo_original>
// kernel: eca_inverted_residual_v2.1
$region0: #{eca_inverted_residual_v2.1}
  #allocation0 [shape = 'u32[]', space=smem, size = 0x4, offset = 0x4, fixed_abs, tag = 'smem constant byte address 0x4 - core index']
  #allocation1 [shape = 'u32[144,128]{1,0:T(1,128)}', space=vmem, size = 0x12000, scoped, tag = 'internal scratch']
  %s0 = inlined_call_operand.hbm [shape: f32[2,256,16], index: 0, kind: input, shape index: {}]
  %s1 = inlined_call_operand.vmem [shape: bf16[16,32], index: 1, kind: input, shape index: {}]
  %s2 = inlined_call_operand.vmem [shape: f32[4,32], index: 2, kind: input, shape index: {}]
  %s3 = inlined_call_operand.vmem [shape: f32[9,32], index: 3, kind: input, shape index: {}]
  %s4 = inlined_call_operand.vmem [shape: bf16[32,16], index: 4, kind: input, shape index: {}]
  %s5 = inlined_call_operand.hbm [shape: f32[2,16], index: 5, kind: input, shape index: {}]
  %s6 = inlined_call_operand.hbm [shape: f32[16,16], index: 6, kind: input, shape index: {}]
  %s7 = inlined_call_operand.hbm [shape: f32[2,256,16], index: 7, kind: output, shape index: {}]
  %s8 = sld [smem:[#allocation0]]
  $region73: #{eca_inverted_residual_v2.1} parent=0
    _
  %s10 = ssub.s32 1, %s8
  %s11 = scalar_select 0, %s10, %s8
  $region1: #{eca_inverted_residual_v2.1} parent=0
    #allocation2 [shape = 'u8[262144]{0}', space=vmem, size = 0x40000, scoped, tag = 'input window, operand 0']
    #allocation3 [shape = 's32[2]{0}', space=sflag, size = 0x8, scoped, tag = 'scoped memory for eca_inverted_residual_v2.1']
    #allocation4 [shape = 's32[2]{0}', space=sflag, size = 0x8, scoped, tag = 'scoped memory for eca_inverted_residual_v2.1']
    #allocation5 [shape = 'u8[1024]{0}', space=vmem, size = 0x400, scoped, tag = 'input window, operand 5, single buffered']
    #allocation6 [shape = 's32[1]{0}', space=sflag, size = 0x4, scoped, tag = 'scoped memory for eca_inverted_residual_v2.1']
    #allocation7 [shape = 'u8[8192]{0}', space=vmem, size = 0x2000, scoped, tag = 'input window, operand 6, single buffered']
    #allocation8 [shape = 'u8[262144]{0}', space=vmem, size = 0x40000, scoped, tag = 'output window, operand 0']
    %12 = vsyncpa [#allocation3], 0
    %s13 = scalar_lea.sflag [#allocation3], 1
    %14 = vsyncpa %s13, 0
    %15 = vsyncpa [#allocation6], 0
    %16 = vsyncpa [#allocation4], 0
    %s17 = scalar_lea.sflag [#allocation4], 1
    %18 = vsyncpa %s17, 0
    loop: start=0, step=1, limit=4
    $region2: #{eca_inverted_residual_v2.1} parent=1 // loop_pre_header
      _
    $region3: #{eca_inverted_residual_v2.1} parent=1 // loop_header
      %s20 = sphi 0, %s24
      %p21 = scmp.ge.s32.totalorder %s20, 4
      %s30 = sphi 0, %s32
      %s33 = sphi 0, %s30
      %s34 = sphi 0, %s33
      %s50 = sphi 0, %s34
      %s54 = sphi 0, %s54
      %s56 = sphi 0, %s54
      %s57 = sphi 0, %s56
      %s71 = sphi 0, %s57
      %s75 = sphi 0, %s75
      %s77 = sphi 0, %s75
      %s78 = sphi 0, %s77
      %s92 = sphi 0, %s78
      %s96 = sphi 0, %s96
      %s98 = sphi 0, %s96
      %s99 = sphi 0, %s98
      %s113 = sphi 0, %s99
      %s117 = sphi 0, %s117
      %s119 = sphi 0, %s117
      %s120 = sphi 0, %s119
      %s134 = sphi 0, %s120
      %s138 = sphi 0, %s138
      %s140 = sphi 0, %s138
      %s141 = sphi 0, %s140
      %s155 = sphi 0, %s141
      %s159 = sphi 0, %s159
      %s161 = sphi 0, %s159
      %s162 = sphi 0, %s161
      %s176 = sphi 0, %s162
      %s182 = sphi 0, %s184
      %s185 = sphi 0, %s182
      %s186 = sphi 0, %s185
      %s202 = sphi 0, %s186
    $region4: #{eca_inverted_residual_v2.1} parent=1 // loop_header_branch
      %23 = sbr.rel (%p21) target = $region8
    $region5: #{eca_inverted_residual_v2.1} parent=1 // loop_body
      %s25 = ssub.s32 %s20, 1
      %s26 = ssub.s32 %s20, 2
      %s27 = sadd.s32 %s20, 1
      %s28 = ssub.s32 %s20, %s27
      %p29 = scmp.eq.s32.totalorder %s28, 0
      %s31 = sadd.s32 %s30, 1
      %s32 = scalar_select %p29, %s30, %s31
      %p35 = pneg %p29
      %p36 = scmp.eq.s32.totalorder %s20, 1
      %p37 = por %p35, %p36
      %p38 = scmp.ne.s32.totalorder %s30, %s33
      %p39 = scmp.eq.s32.totalorder %s20, 0
      %p40 = por %p38, %p39
      %p41 = scmp.ne.s32.totalorder %s30, %s33
      %p42 = scmp.eq.s32.totalorder %s25, 1
      %p43 = por %p41, %p42
      %p44 = scmp.ne.s32.totalorder %s33, %s34
      %p45 = scmp.eq.s32.totalorder %s25, 0
      %p46 = por %p44, %p45
      %p47 = scmp.ne.s32.totalorder %s33, %s34
      %p48 = scmp.eq.s32.totalorder %s26, 1
      %p49 = por %p47, %p48
      %p51 = scmp.ne.s32.totalorder %s34, %s50
      %p52 = scmp.eq.s32.totalorder %s26, 0
      %p53 = por %p51, %p52
      %s55 = sadd.s32 %s54, 1
      %p58 = scmp.eq.s32.totalorder %s20, 1
      %p59 = scmp.ne.s32.totalorder %s54, %s56
      %p60 = scmp.eq.s32.totalorder %s20, 0
      %p61 = por %p59, %p60
      %p62 = scmp.ne.s32.totalorder %s54, %s56
      %p63 = scmp.eq.s32.totalorder %s25, 1
      %p64 = por %p62, %p63
      %p65 = scmp.ne.s32.totalorder %s56, %s57
      %p66 = scmp.eq.s32.totalorder %s25, 0
      %p67 = por %p65, %p66
      %p68 = scmp.ne.s32.totalorder %s56, %s57
      %p69 = scmp.eq.s32.totalorder %s26, 1
      %p70 = por %p68, %p69
      %p72 = scmp.ne.s32.totalorder %s57, %s71
      %p73 = scmp.eq.s32.totalorder %s26, 0
      %p74 = por %p72, %p73
      %s76 = sadd.s32 %s75, 1
      %p79 = scmp.eq.s32.totalorder %s20, 1
      %p80 = scmp.ne.s32.totalorder %s75, %s77
      %p81 = scmp.eq.s32.totalorder %s20, 0
      %p82 = por %p80, %p81
      %p83 = scmp.ne.s32.totalorder %s75, %s77
      %p84 = scmp.eq.s32.totalorder %s25, 1
      %p85 = por %p83, %p84
      %p86 = scmp.ne.s32.totalorder %s77, %s78
      %p87 = scmp.eq.s32.totalorder %s25, 0
      %p88 = por %p86, %p87
      %p89 = scmp.ne.s32.totalorder %s77, %s78
      %p90 = scmp.eq.s32.totalorder %s26, 1
      %p91 = por %p89, %p90
      %p93 = scmp.ne.s32.totalorder %s78, %s92
      %p94 = scmp.eq.s32.totalorder %s26, 0
      %p95 = por %p93, %p94
      %s97 = sadd.s32 %s96, 1
      %p100 = scmp.eq.s32.totalorder %s20, 1
      %p101 = scmp.ne.s32.totalorder %s96, %s98
      %p102 = scmp.eq.s32.totalorder %s20, 0
      %p103 = por %p101, %p102
      %p104 = scmp.ne.s32.totalorder %s96, %s98
      %p105 = scmp.eq.s32.totalorder %s25, 1
      %p106 = por %p104, %p105
      %p107 = scmp.ne.s32.totalorder %s98, %s99
      %p108 = scmp.eq.s32.totalorder %s25, 0
      %p109 = por %p107, %p108
      %p110 = scmp.ne.s32.totalorder %s98, %s99
      %p111 = scmp.eq.s32.totalorder %s26, 1
      %p112 = por %p110, %p111
      %p114 = scmp.ne.s32.totalorder %s99, %s113
      %p115 = scmp.eq.s32.totalorder %s26, 0
      %p116 = por %p114, %p115
      %s118 = sadd.s32 %s117, 1
      %p121 = scmp.eq.s32.totalorder %s20, 1
      %p122 = scmp.ne.s32.totalorder %s117, %s119
      %p123 = scmp.eq.s32.totalorder %s20, 0
      %p124 = por %p122, %p123
      %p125 = scmp.ne.s32.totalorder %s117, %s119
      %p126 = scmp.eq.s32.totalorder %s25, 1
      %p127 = por %p125, %p126
      %p128 = scmp.ne.s32.totalorder %s119, %s120
      %p129 = scmp.eq.s32.totalorder %s25, 0
      %p130 = por %p128, %p129
      %p131 = scmp.ne.s32.totalorder %s119, %s120
      %p132 = scmp.eq.s32.totalorder %s26, 1
      %p133 = por %p131, %p132
      %p135 = scmp.ne.s32.totalorder %s120, %s134
      %p136 = scmp.eq.s32.totalorder %s26, 0
      %p137 = por %p135, %p136
      %s139 = sadd.s32 %s138, 1
      %p142 = scmp.eq.s32.totalorder %s20, 1
      %p143 = scmp.ne.s32.totalorder %s138, %s140
      %p144 = scmp.eq.s32.totalorder %s20, 0
      %p145 = por %p143, %p144
      %p146 = scmp.ne.s32.totalorder %s138, %s140
      %p147 = scmp.eq.s32.totalorder %s25, 1
      %p148 = por %p146, %p147
      %p149 = scmp.ne.s32.totalorder %s140, %s141
      %p150 = scmp.eq.s32.totalorder %s25, 0
      %p151 = por %p149, %p150
      %p152 = scmp.ne.s32.totalorder %s140, %s141
      %p153 = scmp.eq.s32.totalorder %s26, 1
      %p154 = por %p152, %p153
      %p156 = scmp.ne.s32.totalorder %s141, %s155
      %p157 = scmp.eq.s32.totalorder %s26, 0
      %p158 = por %p156, %p157
      %s160 = sadd.s32 %s159, 1
      %p163 = scmp.eq.s32.totalorder %s20, 1
      %p164 = scmp.ne.s32.totalorder %s159, %s161
      %p165 = scmp.eq.s32.totalorder %s20, 0
      %p166 = por %p164, %p165
      %p167 = scmp.ne.s32.totalorder %s159, %s161
      %p168 = scmp.eq.s32.totalorder %s25, 1
      %p169 = por %p167, %p168
      %p170 = scmp.ne.s32.totalorder %s161, %s162
      %p171 = scmp.eq.s32.totalorder %s25, 0
      %p172 = por %p170, %p171
      %p173 = scmp.ne.s32.totalorder %s161, %s162
      %p174 = scmp.eq.s32.totalorder %s26, 1
      %p175 = por %p173, %p174
      %p177 = scmp.ne.s32.totalorder %s162, %s176
      %p178 = scmp.eq.s32.totalorder %s26, 0
      %p179 = por %p177, %p178
      %s180 = ssub.s32 %s20, %s27
      %p181 = scmp.eq.s32.totalorder %s180, 0
      %s183 = sadd.s32 %s182, 1
      %s184 = scalar_select %p181, %s182, %s183
      %p187 = pneg %p181
      %p188 = scmp.eq.s32.totalorder %s20, 1
      %p189 = por %p187, %p188
      %p190 = scmp.ne.s32.totalorder %s182, %s185
      %p191 = scmp.eq.s32.totalorder %s20, 0
      %p192 = por %p190, %p191
      %p193 = scmp.ne.s32.totalorder %s182, %s185
      %p194 = scmp.eq.s32.totalorder %s25, 1
      %p195 = por %p193, %p194
      %p196 = scmp.ne.s32.totalorder %s185, %s186
      %p197 = scmp.eq.s32.totalorder %s25, 0
      %p198 = por %p196, %p197
      %p199 = scmp.ne.s32.totalorder %s185, %s186
      %p200 = scmp.eq.s32.totalorder %s26, 1
      %p201 = por %p199, %p200
      %p203 = scmp.ne.s32.totalorder %s186, %s202
      %p204 = scmp.eq.s32.totalorder %s26, 0
      %p205 = por %p203, %p204
      %p206 = scmp.le.s32.totalorder 1, %s20
      %p207 = scmp.lt.s32.totalorder %s20, 3
      %p208 = pnand %p206, %p207
      %p209 = pneg %p208
      // Predicated region
      $region9: #{eca_inverted_residual_v2.1} parent=5 // pred_check
        _
      $region10: #{eca_inverted_residual_v2.1} parent=5 // pred_check_branch
        %211 = sbr.rel (%p208) target = $region12
      $region11: #{eca_inverted_residual_v2.1} parent=5 // pred_region
        %s212 = ssub.s32 %s20, 1
        // Predicated region
        $region13: #{eca_inverted_residual_v2.1} parent=11 // pred_check
          %p213 = pneg %p67
        $region14: #{eca_inverted_residual_v2.1} parent=11 // pred_check_branch
          %215 = sbr.rel (%p213) target = $region16
        $region15: #{eca_inverted_residual_v2.1} parent=11 // pred_region
          _
        $region16: #{eca_inverted_residual_v2.1} parent=11 // pred_fallthru
          _
        // Predicated region
        $region17: #{eca_inverted_residual_v2.1} parent=11 // pred_check
          %p216 = pneg %p88
        $region18: #{eca_inverted_residual_v2.1} parent=11 // pred_check_branch
          %218 = sbr.rel (%p216) target = $region20
        $region19: #{eca_inverted_residual_v2.1} parent=11 // pred_region
          _
        $region20: #{eca_inverted_residual_v2.1} parent=11 // pred_fallthru
          _
        // Predicated region
        $region21: #{eca_inverted_residual_v2.1} parent=11 // pred_check
          %p219 = pneg %p109
        $region22: #{eca_inverted_residual_v2.1} parent=11 // pred_check_branch
          %221 = sbr.rel (%p219) target = $region24
        $region23: #{eca_inverted_residual_v2.1} parent=11 // pred_region
          _
        $region24: #{eca_inverted_residual_v2.1} parent=11 // pred_fallthru
          _
        // Predicated region
        $region25: #{eca_inverted_residual_v2.1} parent=11 // pred_check
          %p222 = pneg %p130
        $region26: #{eca_inverted_residual_v2.1} parent=11 // pred_check_branch
          %224 = sbr.rel (%p222) target = $region28
        $region27: #{eca_inverted_residual_v2.1} parent=11 // pred_region
          _
        $region28: #{eca_inverted_residual_v2.1} parent=11 // pred_fallthru
          _
        // Predicated region
        $region29: #{eca_inverted_residual_v2.1} parent=11 // pred_check
          %p225 = pneg %p151
        $region30: #{eca_inverted_residual_v2.1} parent=11 // pred_check_branch
          %227 = sbr.rel (%p225) target = $region32
        $region31: #{eca_inverted_residual_v2.1} parent=11 // pred_region
          %s229 = ssub.s32 32, 32
          %230 = vsyncadd [#allocation6], %s229
          %s232 = sshll.u32 [#allocation5], 4
          %s233 = int_to_ptr.vmem [resolvable:$true] %s232
          %235 = dma.hbm_to_vmem [thread:$0]  %s5, 32, %s233, [#allocation6]
        $region32: #{eca_inverted_residual_v2.1} parent=11 // pred_fallthru
          _
        // Predicated region
        $region33: #{eca_inverted_residual_v2.1} parent=11 // pred_check
          %p236 = pneg %p172
        $region34: #{eca_inverted_residual_v2.1} parent=11 // pred_check_branch
          %238 = sbr.rel (%p236) target = $region36
        $region35: #{eca_inverted_residual_v2.1} parent=11 // pred_region
          %s240 = ssub.s32 256, 256
          %241 = vsyncadd [#allocation6], %s240
          %s242 = sshll.u32 [#allocation7], 4
          %s243 = int_to_ptr.vmem [resolvable:$true] %s242
          %248 = dma.hbm_to_vmem [thread:$0]  %s6, 256, %s243, [#allocation6], 128, 128, 8
        $region36: #{eca_inverted_residual_v2.1} parent=11 // pred_fallthru
          _
      $region12: #{eca_inverted_residual_v2.1} parent=5 // pred_fallthru
        _
      %p249 = scmp.lt.s32.totalorder %s20, 2
      // Predicated region
      $region37: #{eca_inverted_residual_v2.1} parent=5 // pred_check
        %p250 = pneg %p249
      $region38: #{eca_inverted_residual_v2.1} parent=5 // pred_check_branch
        %252 = sbr.rel (%p250) target = $region40
      $region39: #{eca_inverted_residual_v2.1} parent=5 // pred_region
        // Predicated region
        $region41: #{eca_inverted_residual_v2.1} parent=39 // pred_check
          %p253 = pneg %p40
        $region42: #{eca_inverted_residual_v2.1} parent=39 // pred_check_branch
          %255 = sbr.rel (%p253) target = $region44
        $region43: #{eca_inverted_residual_v2.1} parent=39 // pred_region
          %s256 = sand.u32 %s30, 1
          %s257 = scalar_lea.sflag [#allocation3], %s256
          %s258 = sand.u32 %s30, 1
          %s259 = smul.addr %s258, 256
          %s260 = scalar_lea.vmem [#allocation2], %s259
          %s262 = ssub.s32 4096, 4096
          %263 = vsyncadd %s257, %s262
          %s264 = smul.addr %s20, 32
          %s265 = smul.addr %s264, 128
          %s266 = scalar_lea.hbm %s0, %s265
          %s267 = sshll.u32 %s260, 4
          %s268 = int_to_ptr.vmem [resolvable:$true] %s267
          %273 = dma.hbm_to_vmem [thread:$0]  %s266, 4096, %s268, %s257, 128, 128, 8
        $region44: #{eca_inverted_residual_v2.1} parent=39 // pred_fallthru
          _
      $region40: #{eca_inverted_residual_v2.1} parent=5 // pred_fallthru
        _
      %p274 = scmp.le.s32.totalorder 1, %s20
      %p275 = scmp.lt.s32.totalorder %s20, 3
      %p276 = pnand %p274, %p275
      %p277 = pneg %p276
      // Predicated region
      $region45: #{eca_inverted_residual_v2.1} parent=5 // pred_check
        _
      $region46: #{eca_inverted_residual_v2.1} parent=5 // pred_check_branch
        %279 = sbr.rel (%p276) target = $region48
      $region47: #{eca_inverted_residual_v2.1} parent=5 // pred_region
        %s280 = ssub.s32 %s20, 1
        %s281 = sand.u32 %s33, 1
        %s282 = scalar_lea.sflag [#allocation3], %s281
        %s283 = sand.u32 %s33, 1
        %s284 = smul.addr %s283, 256
        %s285 = scalar_lea.vmem [#allocation2], %s284
        // Predicated region
        $region49: #{eca_inverted_residual_v2.1} parent=47 // pred_check
          %p286 = pneg %p46
        $region50: #{eca_inverted_residual_v2.1} parent=47 // pred_check_branch
          %288 = sbr.rel (%p286) target = $region52
        $region51: #{eca_inverted_residual_v2.1} parent=47 // pred_region
          %289 = dma.done %s282, 4096
        $region52: #{eca_inverted_residual_v2.1} parent=47 // pred_fallthru
          _
        // Predicated region
        $region53: #{eca_inverted_residual_v2.1} parent=47 // pred_check
          %p290 = pneg %p151
        $region54: #{eca_inverted_residual_v2.1} parent=47 // pred_check_branch
          %292 = sbr.rel (%p290) target = $region56
        $region55: #{eca_inverted_residual_v2.1} parent=47 // pred_region
          %293 = dma.done [#allocation6], 32
        $region56: #{eca_inverted_residual_v2.1} parent=47 // pred_fallthru
          _
        // Predicated region
        $region57: #{eca_inverted_residual_v2.1} parent=47 // pred_check
          %p294 = pneg %p172
        $region58: #{eca_inverted_residual_v2.1} parent=47 // pred_check_branch
          %296 = sbr.rel (%p294) target = $region60
        $region59: #{eca_inverted_residual_v2.1} parent=47 // pred_region
          %297 = dma.done [#allocation6], 256
        $region60: #{eca_inverted_residual_v2.1} parent=47 // pred_fallthru
          _
        %s298 = sand.u32 %s33, 1
        %s299 = scalar_lea.sflag [#allocation3], %s298
        %s300 = sand.u32 %s33, 1
        %s301 = smul.addr %s300, 256
        %s302 = scalar_lea.vmem [#allocation2], %s301
        %p303 = pneg %p46
        %p304 = pneg %p43
        %p305 = pneg %p67
        %p306 = pneg %p64
        %p307 = pneg %p88
        %p308 = pneg %p85
        %p309 = pneg %p109
        %p310 = pneg %p106
        %p311 = pneg %p130
        %p312 = pneg %p127
        %p313 = pneg %p151
        %p314 = pneg %p148
        %p315 = pneg %p172
        %p316 = pneg %p169
        %p317 = pneg %p198
        %p318 = pneg %p195
        %s319 = sand.u32 %s185, 1
        %s320 = scalar_lea.sflag [#allocation4], %s319
        %s321 = sand.u32 %s185, 1
        %s322 = smul.addr %s321, 256
        %s323 = scalar_lea.vmem [#allocation8], %s322
        %v325 = vld [vmem:[%s285] sm:$0xff]
        %v326 = vld [vmem:[%s285 + $0x8] sm:$0xff]
        %v327 = vld [vmem:[%s285 + $0x10] sm:$0xff]
        %v328 = vld [vmem:[%s285 + $0x18] sm:$0xff]
        %v329 = vld [vmem:[%s285 + $0x20] sm:$0xff]
        %v330 = vld [vmem:[%s285 + $0x28] sm:$0xff]
        %v331 = vld [vmem:[%s285 + $0x30] sm:$0xff]
        %v332 = vld [vmem:[%s285 + $0x38] sm:$0xff]
        %v333 = vld [vmem:[%s285 + $0x40] sm:$0xff]
        %v334 = vld [vmem:[%s285 + $0x48] sm:$0xff]
        %v335 = vld [vmem:[%s285 + $0x50] sm:$0xff]
        %v336 = vld [vmem:[%s285 + $0x58] sm:$0xff]
        %v337 = vld [vmem:[%s285 + $0x60] sm:$0xff]
        %v338 = vld [vmem:[%s285 + $0x68] sm:$0xff]
        %v339 = vld [vmem:[%s285 + $0x70] sm:$0xff]
        %v340 = vld [vmem:[%s285 + $0x78] sm:$0xff]
        %v341 = vld [vmem:[%s285 + $0x80] sm:$0xff]
        %v342 = vld [vmem:[%s285 + $0x88] sm:$0xff]
        %v343 = vld [vmem:[%s285 + $0x90] sm:$0xff]
        %v344 = vld [vmem:[%s285 + $0x98] sm:$0xff]
        %v345 = vld [vmem:[%s285 + $0xa0] sm:$0xff]
        %v346 = vld [vmem:[%s285 + $0xa8] sm:$0xff]
        %v347 = vld [vmem:[%s285 + $0xb0] sm:$0xff]
        %v348 = vld [vmem:[%s285 + $0xb8] sm:$0xff]
        %v349 = vld [vmem:[%s285 + $0xc0] sm:$0xff]
        %v350 = vld [vmem:[%s285 + $0xc8] sm:$0xff]
        %v351 = vld [vmem:[%s285 + $0xd0] sm:$0xff]
        %v352 = vld [vmem:[%s285 + $0xd8] sm:$0xff]
        %v353 = vld [vmem:[%s285 + $0xe0] sm:$0xff]
        %v354 = vld [vmem:[%s285 + $0xe8] sm:$0xff]
        %v355 = vld [vmem:[%s285 + $0xf0] sm:$0xff]
        %v356 = vld [vmem:[%s285 + $0xf8] sm:$0xff]
        %v357 = vpack.c.bf16 %v326, %v325
        %v358 = vpack.c.bf16 %v328, %v327
        %v359 = vpack.c.bf16 %v330, %v329
        %v360 = vpack.c.bf16 %v332, %v331
        %v361 = vpack.c.bf16 %v334, %v333
        %v362 = vpack.c.bf16 %v336, %v335
        %v363 = vpack.c.bf16 %v338, %v337
        %v364 = vpack.c.bf16 %v340, %v339
        %v365 = vpack.c.bf16 %v342, %v341
        %v366 = vpack.c.bf16 %v344, %v343
        %v367 = vpack.c.bf16 %v346, %v345
        %v368 = vpack.c.bf16 %v348, %v347
        %v369 = vpack.c.bf16 %v350, %v349
        %v370 = vpack.c.bf16 %v352, %v351
        %v371 = vpack.c.bf16 %v354, %v353
        %v372 = vpack.c.bf16 %v356, %v355
        %v373 = vld [vmem:[%s1] sm:$0xf]
        %v374 = vld [vmem:[%s1 + $0x4] sm:$0xf]
        %v377 = vunpack.c.l.b16 %v373
        %v378 = vunpack.c.l.b16 %v374
        %v379 = vpack.c.b16 %v378, %v377
        %vm381 = vcmask 130048
        %v383 = vsel %vm381, %v357, 0
        %v386 = vsel %vm381, %v358, 0
        %v389 = vsel %vm381, %v359, 0
        %v392 = vsel %vm381, %v360, 0
        %v395 = vsel %vm381, %v361, 0
        %v398 = vsel %vm381, %v362, 0
        %v401 = vsel %vm381, %v363, 0
        %v404 = vsel %vm381, %v364, 0
        %v407 = vsel %vm381, %v365, 0
        %v410 = vsel %vm381, %v366, 0
        %v413 = vsel %vm381, %v367, 0
        %v416 = vsel %vm381, %v368, 0
        %v419 = vsel %vm381, %v369, 0
        %v422 = vsel %vm381, %v370, 0
        %v425 = vsel %vm381, %v371, 0
        %v428 = vsel %vm381, %v372, 0
        %430 = vmatprep.subr.bf16.mxu0 0
        %431 = vmatpush1.bf16.msra.mxu0 0
        %432 = vmatprep.subr.bf16.mxu0 0
        %433 = vmatpush1.bf16.msra.mxu0 0
        %434 = vmatprep.subr.bf16.mxu0 0
        %435 = vmatpush1.bf16.msra.mxu0 0
        %436 = vmatprep.subr.bf16.mxu0 0
        %437 = vmatpush1.bf16.msra.mxu0 0
        %438 = vmatprep.subr.bf16.mxu0 0
        %439 = vmatpush1.bf16.msra.mxu0 0
        %440 = vmatprep.subr.bf16.mxu0 0
        %441 = vmatpush1.bf16.msra.mxu0 0
        %442 = vmatprep.subr.bf16.mxu0 0
        %443 = vmatpush1.bf16.msra.mxu0 0
        %444 = vmatprep.subr.bf16.mxu0 0
        %445 = vmatpush1.bf16.msra.mxu0 %v379
        %446 = vmatprep.subr.bf16.mxu0 0
        %447 = vmatpush2.bf16.msra.mxu0 0
        %448 = vmatprep.subr.bf16.mxu0 0
        %449 = vmatpush2.bf16.msra.mxu0 0
        %450 = vmatprep.subr.bf16.mxu0 0
        %451 = vmatpush2.bf16.msra.mxu0 0
        %452 = vmatprep.subr.bf16.mxu0 0
        %453 = vmatpush2.bf16.msra.mxu0 0
        %454 = vmatprep.subr.bf16.mxu0 0
        %455 = vmatpush2.bf16.msra.mxu0 0
        %456 = vmatprep.subr.bf16.mxu0 0
        %457 = vmatpush2.bf16.msra.mxu0 0
        %458 = vmatprep.subr.bf16.mxu0 0
        %459 = vmatpush2.bf16.msra.mxu0 0
        %460 = vmatprep.subr.bf16.mxu0 0
        %461 = vmatpush2.bf16.msra.mxu0 0
        %462 = vmatprep.mubr.bf16.mxu0 0
        %463 = vmatmul.mubr.bf16.gmra.mxu0 %v383
        %v464 = vpop.f32.mrf.mxu0
        %v465 = vadd.f32 0.0, %v464
        %v466 = vpop.f32.mrf.mxu0
        %v467 = vpop.f32.mrf.mxu0
        %v468 = vadd.f32 0.0, %v467
        %v469 = vpop.f32.mrf.mxu0
        %470 = vmatprep.mubr.bf16.mxu0 0
        %471 = vmatmul.mubr.bf16.gmra.mxu0 %v386
        %v472 = vpop.f32.mrf.mxu0
        %v473 = vadd.f32 0.0, %v472
        %v474 = vpop.f32.mrf.mxu0
        %v475 = vpop.f32.mrf.mxu0
        %v476 = vadd.f32 0.0, %v475
        %v477 = vpop.f32.mrf.mxu0
        %478 = vmatprep.mubr.bf16.mxu0 0
        %479 = vmatmul.mubr.bf16.gmra.mxu0 %v389
        %v480 = vpop.f32.mrf.mxu0
        %v481 = vadd.f32 0.0, %v480
        %v482 = vpop.f32.mrf.mxu0
        %v483 = vpop.f32.mrf.mxu0
        %v484 = vadd.f32 0.0, %v483
        %v485 = vpop.f32.mrf.mxu0
        %486 = vmatprep.mubr.bf16.mxu0 0
        %487 = vmatmul.mubr.bf16.gmra.mxu0 %v392
        %v488 = vpop.f32.mrf.mxu0
        %v489 = vadd.f32 0.0, %v488
        %v490 = vpop.f32.mrf.mxu0
        %v491 = vpop.f32.mrf.mxu0
        %v492 = vadd.f32 0.0, %v491
        %v493 = vpop.f32.mrf.mxu0
        %494 = vmatprep.mubr.bf16.mxu0 0
        %495 = vmatmul.mubr.bf16.gmra.mxu0 %v395
        %v496 = vpop.f32.mrf.mxu0
        %v497 = vadd.f32 0.0, %v496
        %v498 = vpop.f32.mrf.mxu0
        %v499 = vpop.f32.mrf.mxu0
        %v500 = vadd.f32 0.0, %v499
        %v501 = vpop.f32.mrf.mxu0
        %502 = vmatprep.mubr.bf16.mxu0 0
        %503 = vmatmul.mubr.bf16.gmra.mxu0 %v398
        %v504 = vpop.f32.mrf.mxu0
        %v505 = vadd.f32 0.0, %v504
        %v506 = vpop.f32.mrf.mxu0
        %v507 = vpop.f32.mrf.mxu0
        %v508 = vadd.f32 0.0, %v507
        %v509 = vpop.f32.mrf.mxu0
        %510 = vmatprep.mubr.bf16.mxu0 0
        %511 = vmatmul.mubr.bf16.gmra.mxu0 %v401
        %v512 = vpop.f32.mrf.mxu0
        %v513 = vadd.f32 0.0, %v512
        %v514 = vpop.f32.mrf.mxu0
        %v515 = vpop.f32.mrf.mxu0
        %v516 = vadd.f32 0.0, %v515
        %v517 = vpop.f32.mrf.mxu0
        %518 = vmatprep.mubr.bf16.mxu0 0
        %519 = vmatmul.mubr.bf16.gmra.mxu0 %v404
        %v520 = vpop.f32.mrf.mxu0
        %v521 = vadd.f32 0.0, %v520
        %v522 = vpop.f32.mrf.mxu0
        %v523 = vpop.f32.mrf.mxu0
        %v524 = vadd.f32 0.0, %v523
        %v525 = vpop.f32.mrf.mxu0
        %526 = vmatprep.mubr.bf16.mxu0 0
        %527 = vmatmul.mubr.bf16.gmra.mxu0 %v407
        %v528 = vpop.f32.mrf.mxu0
        %v529 = vadd.f32 0.0, %v528
        %v530 = vpop.f32.mrf.mxu0
        %v531 = vpop.f32.mrf.mxu0
        %v532 = vadd.f32 0.0, %v531
        %v533 = vpop.f32.mrf.mxu0
        %534 = vmatprep.mubr.bf16.mxu0 0
        %535 = vmatmul.mubr.bf16.gmra.mxu0 %v410
        %v536 = vpop.f32.mrf.mxu0
        %v537 = vadd.f32 0.0, %v536
        %v538 = vpop.f32.mrf.mxu0
        %v539 = vpop.f32.mrf.mxu0
        %v540 = vadd.f32 0.0, %v539
        %v541 = vpop.f32.mrf.mxu0
        %542 = vmatprep.mubr.bf16.mxu0 0
        %543 = vmatmul.mubr.bf16.gmra.mxu0 %v413
        %v544 = vpop.f32.mrf.mxu0
        %v545 = vadd.f32 0.0, %v544
        %v546 = vpop.f32.mrf.mxu0
        %v547 = vpop.f32.mrf.mxu0
        %v548 = vadd.f32 0.0, %v547
        %v549 = vpop.f32.mrf.mxu0
        %550 = vmatprep.mubr.bf16.mxu0 0
        %551 = vmatmul.mubr.bf16.gmra.mxu0 %v416
        %v552 = vpop.f32.mrf.mxu0
        %v553 = vadd.f32 0.0, %v552
        %v554 = vpop.f32.mrf.mxu0
        %v555 = vpop.f32.mrf.mxu0
        %v556 = vadd.f32 0.0, %v555
        %v557 = vpop.f32.mrf.mxu0
        %558 = vmatprep.mubr.bf16.mxu0 0
        %559 = vmatmul.mubr.bf16.gmra.mxu0 %v419
        %v560 = vpop.f32.mrf.mxu0
        %v561 = vadd.f32 0.0, %v560
        %v562 = vpop.f32.mrf.mxu0
        %v563 = vpop.f32.mrf.mxu0
        %v564 = vadd.f32 0.0, %v563
        %v565 = vpop.f32.mrf.mxu0
        %566 = vmatprep.mubr.bf16.mxu0 0
        %567 = vmatmul.mubr.bf16.gmra.mxu0 %v422
        %v568 = vpop.f32.mrf.mxu0
        %v569 = vadd.f32 0.0, %v568
        %v570 = vpop.f32.mrf.mxu0
        %v571 = vpop.f32.mrf.mxu0
        %v572 = vadd.f32 0.0, %v571
        %v573 = vpop.f32.mrf.mxu0
        %574 = vmatprep.mubr.bf16.mxu0 0
        %575 = vmatmul.mubr.bf16.gmra.mxu0 %v425
        %v576 = vpop.f32.mrf.mxu0
        %v577 = vadd.f32 0.0, %v576
        %v578 = vpop.f32.mrf.mxu0
        %v579 = vpop.f32.mrf.mxu0
        %v580 = vadd.f32 0.0, %v579
        %v581 = vpop.f32.mrf.mxu0
        %582 = vmatprep.mubr.bf16.mxu0 0
        %583 = vmatmul.mubr.bf16.gmra.mxu0 %v428
        %v584 = vpop.f32.mrf.mxu0
        %v585 = vadd.f32 0.0, %v584
        %v586 = vpop.f32.mrf.mxu0
        %v587 = vpop.f32.mrf.mxu0
        %v588 = vadd.f32 0.0, %v587
        %v589 = vpop.f32.mrf.mxu0
        %590 = vdwg.mxu0
        %v591 = vld [vmem:[%s2] sm:$0x1]
        %v592 = vld [vmem:[%s2 + $0x1] sm:$0x1]
        %v593 = vld [vmem:[%s2 + $0x2] sm:$0x1]
        %v594 = vld [vmem:[%s2 + $0x3] sm:$0x1]
        %v595 = vlaneseq
        %v596 = vshrl.u32 %v595, 7
        %v597 = vsub.s32 0, %v596
        %v598 = vrot.slane %v591, %v597
        %v599 = vmul.f32 %v465, %v598
        %v600 = vmul.f32 %v468, %v598
        %v601 = vmul.f32 %v473, %v598
        %v602 = vmul.f32 %v476, %v598
        %v603 = vmul.f32 %v481, %v598
        %v604 = vmul.f32 %v484, %v598
        %v605 = vmul.f32 %v489, %v598
        %v606 = vmul.f32 %v492, %v598
        %v607 = vmul.f32 %v497, %v598
        %v608 = vmul.f32 %v500, %v598
        %v609 = vmul.f32 %v505, %v598
        %v610 = vmul.f32 %v508, %v598
        %v611 = vmul.f32 %v513, %v598
        %v612 = vmul.f32 %v516, %v598
        %v613 = vmul.f32 %v521, %v598
        %v614 = vmul.f32 %v524, %v598
        %v615 = vmul.f32 %v529, %v598
        %v616 = vmul.f32 %v532, %v598
        %v617 = vmul.f32 %v537, %v598
        %v618 = vmul.f32 %v540, %v598
        %v619 = vmul.f32 %v545, %v598
        %v620 = vmul.f32 %v548, %v598
        %v621 = vmul.f32 %v553, %v598
        %v622 = vmul.f32 %v556, %v598
        %v623 = vmul.f32 %v561, %v598
        %v624 = vmul.f32 %v564, %v598
        %v625 = vmul.f32 %v569, %v598
        %v626 = vmul.f32 %v572, %v598
        %v627 = vmul.f32 %v577, %v598
        %v628 = vmul.f32 %v580, %v598
        %v629 = vmul.f32 %v585, %v598
        %v630 = vmul.f32 %v588, %v598
        %v631 = vlaneseq
        %v632 = vshrl.u32 %v631, 7
        %v633 = vsub.s32 0, %v632
        %v634 = vrot.slane %v592, %v633
        %v635 = vadd.f32 %v599, %v634
        %v636 = vadd.f32 %v600, %v634
        %v637 = vadd.f32 %v601, %v634
        %v638 = vadd.f32 %v602, %v634
        %v639 = vadd.f32 %v603, %v634
        %v640 = vadd.f32 %v604, %v634
        %v641 = vadd.f32 %v605, %v634
        %v642 = vadd.f32 %v606, %v634
        %v643 = vadd.f32 %v607, %v634
        %v644 = vadd.f32 %v608, %v634
        %v645 = vadd.f32 %v609, %v634
        %v646 = vadd.f32 %v610, %v634
        %v647 = vadd.f32 %v611, %v634
        %v648 = vadd.f32 %v612, %v634
        %v649 = vadd.f32 %v613, %v634
        %v650 = vadd.f32 %v614, %v634
        %v651 = vadd.f32 %v615, %v634
        %v652 = vadd.f32 %v616, %v634
        %v653 = vadd.f32 %v617, %v634
        %v654 = vadd.f32 %v618, %v634
        %v655 = vadd.f32 %v619, %v634
        %v656 = vadd.f32 %v620, %v634
        %v657 = vadd.f32 %v621, %v634
        %v658 = vadd.f32 %v622, %v634
        %v659 = vadd.f32 %v623, %v634
        %v660 = vadd.f32 %v624, %v634
        %v661 = vadd.f32 %v625, %v634
        %v662 = vadd.f32 %v626, %v634
        %v663 = vadd.f32 %v627, %v634
        %v664 = vadd.f32 %v628, %v634
        %v665 = vadd.f32 %v629, %v634
        %v666 = vadd.f32 %v630, %v634
        %v667 = vmax.f32 %v635, 0.0
        %v668 = vmax.f32 %v636, 0.0
        %v669 = vmax.f32 %v637, 0.0
        %v670 = vmax.f32 %v638, 0.0
        %v671 = vmax.f32 %v639, 0.0
        %v672 = vmax.f32 %v640, 0.0
        %v673 = vmax.f32 %v641, 0.0
        %v674 = vmax.f32 %v642, 0.0
        %v675 = vmax.f32 %v643, 0.0
        %v676 = vmax.f32 %v644, 0.0
        %v677 = vmax.f32 %v645, 0.0
        %v678 = vmax.f32 %v646, 0.0
        %v679 = vmax.f32 %v647, 0.0
        %v680 = vmax.f32 %v648, 0.0
        %v681 = vmax.f32 %v649, 0.0
        %v682 = vmax.f32 %v650, 0.0
        %v683 = vmax.f32 %v651, 0.0
        %v684 = vmax.f32 %v652, 0.0
        %v685 = vmax.f32 %v653, 0.0
        %v686 = vmax.f32 %v654, 0.0
        %v687 = vmax.f32 %v655, 0.0
        %v688 = vmax.f32 %v656, 0.0
        %v689 = vmax.f32 %v657, 0.0
        %v690 = vmax.f32 %v658, 0.0
        %v691 = vmax.f32 %v659, 0.0
        %v692 = vmax.f32 %v660, 0.0
        %v693 = vmax.f32 %v661, 0.0
        %v694 = vmax.f32 %v662, 0.0
        %v695 = vmax.f32 %v663, 0.0
        %v696 = vmax.f32 %v664, 0.0
        %v697 = vmax.f32 %v665, 0.0
        %v698 = vmax.f32 %v666, 0.0
        %v699 = vmin.f32 %v667, 6.0
        %v700 = vmin.f32 %v668, 6.0
        %v701 = vmin.f32 %v669, 6.0
        %v702 = vmin.f32 %v670, 6.0
        %v703 = vmin.f32 %v671, 6.0
        %v704 = vmin.f32 %v672, 6.0
        %v705 = vmin.f32 %v673, 6.0
        %v706 = vmin.f32 %v674, 6.0
        %v707 = vmin.f32 %v675, 6.0
        %v708 = vmin.f32 %v676, 6.0
        %v709 = vmin.f32 %v677, 6.0
        %v710 = vmin.f32 %v678, 6.0
        %v711 = vmin.f32 %v679, 6.0
        %v712 = vmin.f32 %v680, 6.0
        %v713 = vmin.f32 %v681, 6.0
        %v714 = vmin.f32 %v682, 6.0
        %v715 = vmin.f32 %v683, 6.0
        %v716 = vmin.f32 %v684, 6.0
        %v717 = vmin.f32 %v685, 6.0
        %v718 = vmin.f32 %v686, 6.0
        %v719 = vmin.f32 %v687, 6.0
        %v720 = vmin.f32 %v688, 6.0
        %v721 = vmin.f32 %v689, 6.0
        %v722 = vmin.f32 %v690, 6.0
        %v723 = vmin.f32 %v691, 6.0
        %v724 = vmin.f32 %v692, 6.0
        %v725 = vmin.f32 %v693, 6.0
        %v726 = vmin.f32 %v694, 6.0
        %v727 = vmin.f32 %v695, 6.0
        %v728 = vmin.f32 %v696, 6.0
        %v729 = vmin.f32 %v697, 6.0
        %v730 = vmin.f32 %v698, 6.0
        %v731 = vlaneseq
        %v732 = vshrl.u32 %v731, 7
        %v733 = vadd.s32 %v732, 8
        %v734 = vadd.s32 %v732, 16
        %v735 = vadd.s32 %v732, 24
        %v736 = vadd.s32 %v732, 32
        %v737 = vadd.s32 %v732, 40
        %v738 = vadd.s32 %v732, 48
        %v739 = vadd.s32 %v732, 56
        %v740 = vadd.s32 %v732, 64
        %v741 = vadd.s32 %v732, 72
        %v742 = vadd.s32 %v732, 80
        %v743 = vadd.s32 %v732, 88
        %v744 = vadd.s32 %v732, 96
        %v745 = vadd.s32 %v732, 104
        %v746 = vadd.s32 %v732, 112
        %v747 = vadd.s32 %v732, 120
        %v748 = vadd.s32 %v732, 128
        %v749 = vadd.s32 %v732, 136
        %v750 = vadd.s32 %v732, 144
        %v751 = vadd.s32 %v732, 152
        %v752 = vadd.s32 %v732, 160
        %v753 = vadd.s32 %v732, 168
        %v754 = vadd.s32 %v732, 176
        %v755 = vadd.s32 %v732, 184
        %v756 = vadd.s32 %v732, 192
        %v757 = vadd.s32 %v732, 200
        %v758 = vadd.s32 %v732, 208
        %v759 = vadd.s32 %v732, 216
        %v760 = vadd.s32 %v732, 224
        %v761 = vadd.s32 %v732, 232
        %v762 = vadd.s32 %v732, 240
        %v763 = vadd.s32 %v732, 248
        %vm764 = vcmp.lt.s32.totalorder %v732, 0
        %v765 = vsub.s32 0, %v732
        %v766 = vsel %vm764, %v765, %v732
        %v767 = vshrl.u32 %v766, 4
        %v768 = vand.u32 %v766, 15
        %v769 = vsub.s32 0, %v768
        %v770 = vsel %vm764, %v769, %v768
        %vm771 = vcmp.lt.s32.totalorder %v733, 0
        %v772 = vsub.s32 0, %v733
        %v773 = vsel %vm771, %v772, %v733
        %v774 = vshrl.u32 %v773, 4
        %v775 = vand.u32 %v773, 15
        %v776 = vsub.s32 0, %v775
        %v777 = vsel %vm771, %v776, %v775
        %vm778 = vcmp.lt.s32.totalorder %v734, 0
        %v779 = vsub.s32 0, %v734
        %v780 = vsel %vm778, %v779, %v734
        %v781 = vshrl.u32 %v780, 4
        %v782 = vand.u32 %v780, 15
        %v783 = vsub.s32 0, %v782
        %v784 = vsel %vm778, %v783, %v782
        %vm785 = vcmp.lt.s32.totalorder %v735, 0
        %v786 = vsub.s32 0, %v735
        %v787 = vsel %vm785, %v786, %v735
        %v788 = vshrl.u32 %v787, 4
        %v789 = vand.u32 %v787, 15
        %v790 = vsub.s32 0, %v789
        %v791 = vsel %vm785, %v790, %v789
        %vm792 = vcmp.lt.s32.totalorder %v736, 0
        %v793 = vsub.s32 0, %v736
        %v794 = vsel %vm792, %v793, %v736
        %v795 = vshrl.u32 %v794, 4
        %v796 = vand.u32 %v794, 15
        %v797 = vsub.s32 0, %v796
        %v798 = vsel %vm792, %v797, %v796
        %vm799 = vcmp.lt.s32.totalorder %v737, 0
        %v800 = vsub.s32 0, %v737
        %v801 = vsel %vm799, %v800, %v737
        %v802 = vshrl.u32 %v801, 4
        %v803 = vand.u32 %v801, 15
        %v804 = vsub.s32 0, %v803
        %v805 = vsel %vm799, %v804, %v803
        %vm806 = vcmp.lt.s32.totalorder %v738, 0
        %v807 = vsub.s32 0, %v738
        %v808 = vsel %vm806, %v807, %v738
        %v809 = vshrl.u32 %v808, 4
        %v810 = vand.u32 %v808, 15
        %v811 = vsub.s32 0, %v810
        %v812 = vsel %vm806, %v811, %v810
        %vm813 = vcmp.lt.s32.totalorder %v739, 0
        %v814 = vsub.s32 0, %v739
        %v815 = vsel %vm813, %v814, %v739
        %v816 = vshrl.u32 %v815, 4
        %v817 = vand.u32 %v815, 15
        %v818 = vsub.s32 0, %v817
        %v819 = vsel %vm813, %v818, %v817
        %vm820 = vcmp.lt.s32.totalorder %v740, 0
        %v821 = vsub.s32 0, %v740
        %v822 = vsel %vm820, %v821, %v740
        %v823 = vshrl.u32 %v822, 4
        %v824 = vand.u32 %v822, 15
        %v825 = vsub.s32 0, %v824
        %v826 = vsel %vm820, %v825, %v824
        %vm827 = vcmp.lt.s32.totalorder %v741, 0
        %v828 = vsub.s32 0, %v741
        %v829 = vsel %vm827, %v828, %v741
        %v830 = vshrl.u32 %v829, 4
        %v831 = vand.u32 %v829, 15
        %v832 = vsub.s32 0, %v831
        %v833 = vsel %vm827, %v832, %v831
        %vm834 = vcmp.lt.s32.totalorder %v742, 0
        %v835 = vsub.s32 0, %v742
        %v836 = vsel %vm834, %v835, %v742
        %v837 = vshrl.u32 %v836, 4
        %v838 = vand.u32 %v836, 15
        %v839 = vsub.s32 0, %v838
        %v840 = vsel %vm834, %v839, %v838
        %vm841 = vcmp.lt.s32.totalorder %v743, 0
        %v842 = vsub.s32 0, %v743
        %v843 = vsel %vm841, %v842, %v743
        %v844 = vshrl.u32 %v843, 4
        %v845 = vand.u32 %v843, 15
        %v846 = vsub.s32 0, %v845
        %v847 = vsel %vm841, %v846, %v845
        %vm848 = vcmp.lt.s32.totalorder %v744, 0
        %v849 = vsub.s32 0, %v744
        %v850 = vsel %vm848, %v849, %v744
        %v851 = vshrl.u32 %v850, 4
        %v852 = vand.u32 %v850, 15
        %v853 = vsub.s32 0, %v852
        %v854 = vsel %vm848, %v853, %v852
        %vm855 = vcmp.lt.s32.totalorder %v745, 0
        %v856 = vsub.s32 0, %v745
        %v857 = vsel %vm855, %v856, %v745
        %v858 = vshrl.u32 %v857, 4
        %v859 = vand.u32 %v857, 15
        %v860 = vsub.s32 0, %v859
        %v861 = vsel %vm855, %v860, %v859
        %vm862 = vcmp.lt.s32.totalorder %v746, 0
        %v863 = vsub.s32 0, %v746
        %v864 = vsel %vm862, %v863, %v746
        %v865 = vshrl.u32 %v864, 4
        %v866 = vand.u32 %v864, 15
        %v867 = vsub.s32 0, %v866
        %v868 = vsel %vm862, %v867, %v866
        %vm869 = vcmp.lt.s32.totalorder %v747, 0
        %v870 = vsub.s32 0, %v747
        %v871 = vsel %vm869, %v870, %v747
        %v872 = vshrl.u32 %v871, 4
        %v873 = vand.u32 %v871, 15
        %v874 = vsub.s32 0, %v873
        %v875 = vsel %vm869, %v874, %v873
        %vm876 = vcmp.lt.s32.totalorder %v748, 0
        %v877 = vsub.s32 0, %v748
        %v878 = vsel %vm876, %v877, %v748
        %v879 = vshrl.u32 %v878, 4
        %v880 = vand.u32 %v878, 15
        %v881 = vsub.s32 0, %v880
        %v882 = vsel %vm876, %v881, %v880
        %vm883 = vcmp.lt.s32.totalorder %v749, 0
        %v884 = vsub.s32 0, %v749
        %v885 = vsel %vm883, %v884, %v749
        %v886 = vshrl.u32 %v885, 4
        %v887 = vand.u32 %v885, 15
        %v888 = vsub.s32 0, %v887
        %v889 = vsel %vm883, %v888, %v887
        %vm890 = vcmp.lt.s32.totalorder %v750, 0
        %v891 = vsub.s32 0, %v750
        %v892 = vsel %vm890, %v891, %v750
        %v893 = vshrl.u32 %v892, 4
        %v894 = vand.u32 %v892, 15
        %v895 = vsub.s32 0, %v894
        %v896 = vsel %vm890, %v895, %v894
        %vm897 = vcmp.lt.s32.totalorder %v751, 0
        %v898 = vsub.s32 0, %v751
        %v899 = vsel %vm897, %v898, %v751
        %v900 = vshrl.u32 %v899, 4
        %v901 = vand.u32 %v899, 15
        %v902 = vsub.s32 0, %v901
        %v903 = vsel %vm897, %v902, %v901
        %vm904 = vcmp.lt.s32.totalorder %v752, 0
        %v905 = vsub.s32 0, %v752
        %v906 = vsel %vm904, %v905, %v752
        %v907 = vshrl.u32 %v906, 4
        %v908 = vand.u32 %v906, 15
        %v909 = vsub.s32 0, %v908
        %v910 = vsel %vm904, %v909, %v908
        %vm911 = vcmp.lt.s32.totalorder %v753, 0
        %v912 = vsub.s32 0, %v753
        %v913 = vsel %vm911, %v912, %v753
        %v914 = vshrl.u32 %v913, 4
        %v915 = vand.u32 %v913, 15
        %v916 = vsub.s32 0, %v915
        %v917 = vsel %vm911, %v916, %v915
        %vm918 = vcmp.lt.s32.totalorder %v754, 0
        %v919 = vsub.s32 0, %v754
        %v920 = vsel %vm918, %v919, %v754
        %v921 = vshrl.u32 %v920, 4
        %v922 = vand.u32 %v920, 15
        %v923 = vsub.s32 0, %v922
        %v924 = vsel %vm918, %v923, %v922
        %vm925 = vcmp.lt.s32.totalorder %v755, 0
        %v926 = vsub.s32 0, %v755
        %v927 = vsel %vm925, %v926, %v755
        %v928 = vshrl.u32 %v927, 4
        %v929 = vand.u32 %v927, 15
        %v930 = vsub.s32 0, %v929
        %v931 = vsel %vm925, %v930, %v929
        %vm932 = vcmp.lt.s32.totalorder %v756, 0
        %v933 = vsub.s32 0, %v756
        %v934 = vsel %vm932, %v933, %v756
        %v935 = vshrl.u32 %v934, 4
        %v936 = vand.u32 %v934, 15
        %v937 = vsub.s32 0, %v936
        %v938 = vsel %vm932, %v937, %v936
        %vm939 = vcmp.lt.s32.totalorder %v757, 0
        %v940 = vsub.s32 0, %v757
        %v941 = vsel %vm939, %v940, %v757
        %v942 = vshrl.u32 %v941, 4
        %v943 = vand.u32 %v941, 15
        %v944 = vsub.s32 0, %v943
        %v945 = vsel %vm939, %v944, %v943
        %vm946 = vcmp.lt.s32.totalorder %v758, 0
        %v947 = vsub.s32 0, %v758
        %v948 = vsel %vm946, %v947, %v758
        %v949 = vshrl.u32 %v948, 4
        %v950 = vand.u32 %v948, 15
        %v951 = vsub.s32 0, %v950
        %v952 = vsel %vm946, %v951, %v950
        %vm953 = vcmp.lt.s32.totalorder %v759, 0
        %v954 = vsub.s32 0, %v759
        %v955 = vsel %vm953, %v954, %v759
        %v956 = vshrl.u32 %v955, 4
        %v957 = vand.u32 %v955, 15
        %v958 = vsub.s32 0, %v957
        %v959 = vsel %vm953, %v958, %v957
        %vm960 = vcmp.lt.s32.totalorder %v760, 0
        %v961 = vsub.s32 0, %v760
        %v962 = vsel %vm960, %v961, %v760
        %v963 = vshrl.u32 %v962, 4
        %v964 = vand.u32 %v962, 15
        %v965 = vsub.s32 0, %v964
        %v966 = vsel %vm960, %v965, %v964
        %vm967 = vcmp.lt.s32.totalorder %v761, 0
        %v968 = vsub.s32 0, %v761
        %v969 = vsel %vm967, %v968, %v761
        %v970 = vshrl.u32 %v969, 4
        %v971 = vand.u32 %v969, 15
        %v972 = vsub.s32 0, %v971
        %v973 = vsel %vm967, %v972, %v971
        %vm974 = vcmp.lt.s32.totalorder %v762, 0
        %v975 = vsub.s32 0, %v762
        %v976 = vsel %vm974, %v975, %v762
        %v977 = vshrl.u32 %v976, 4
        %v978 = vand.u32 %v976, 15
        %v979 = vsub.s32 0, %v978
        %v980 = vsel %vm974, %v979, %v978
        %vm981 = vcmp.lt.s32.totalorder %v763, 0
        %v982 = vsub.s32 0, %v763
        %v983 = vsel %vm981, %v982, %v763
        %v984 = vshrl.u32 %v983, 4
        %v985 = vand.u32 %v983, 15
        %v986 = vsub.s32 0, %v985
        %v987 = vsel %vm981, %v986, %v985
        %vm988 = vcmp.ne.s32.totalorder %v770, 0
        %vm989 = vcmp.ne.s32.totalorder %v777, 0
        %vm990 = vcmp.ne.s32.totalorder %v784, 0
        %vm991 = vcmp.ne.s32.totalorder %v791, 0
        %vm992 = vcmp.ne.s32.totalorder %v798, 0
        %vm993 = vcmp.ne.s32.totalorder %v805, 0
        %vm994 = vcmp.ne.s32.totalorder %v812, 0
        %vm995 = vcmp.ne.s32.totalorder %v819, 0
        %vm996 = vcmp.ne.s32.totalorder %v826, 0
        %vm997 = vcmp.ne.s32.totalorder %v833, 0
        %vm998 = vcmp.ne.s32.totalorder %v840, 0
        %vm999 = vcmp.ne.s32.totalorder %v847, 0
        %vm1000 = vcmp.ne.s32.totalorder %v854, 0
        %vm1001 = vcmp.ne.s32.totalorder %v861, 0
        %vm1002 = vcmp.ne.s32.totalorder %v868, 0
        %vm1003 = vcmp.ne.s32.totalorder %v875, 0
        %vm1004 = vcmp.ne.s32.totalorder %v882, 0
        %vm1005 = vcmp.ne.s32.totalorder %v889, 0
        %vm1006 = vcmp.ne.s32.totalorder %v896, 0
        %vm1007 = vcmp.ne.s32.totalorder %v903, 0
        %vm1008 = vcmp.ne.s32.totalorder %v910, 0
        %vm1009 = vcmp.ne.s32.totalorder %v917, 0
        %vm1010 = vcmp.ne.s32.totalorder %v924, 0
        %vm1011 = vcmp.ne.s32.totalorder %v931, 0
        %vm1012 = vcmp.ne.s32.totalorder %v938, 0
        %vm1013 = vcmp.ne.s32.totalorder %v945, 0
        %vm1014 = vcmp.ne.s32.totalorder %v952, 0
        %vm1015 = vcmp.ne.s32.totalorder %v959, 0
        %vm1016 = vcmp.ne.s32.totalorder %v966, 0
        %vm1017 = vcmp.ne.s32.totalorder %v973, 0
        %vm1018 = vcmp.ne.s32.totalorder %v980, 0
        %vm1019 = vcmp.ne.s32.totalorder %v987, 0
        %vm1020 = vcmp.lt.s32.totalorder %v770, 0
        %vm1021 = vcmp.lt.s32.totalorder %v777, 0
        %vm1022 = vcmp.lt.s32.totalorder %v784, 0
        %vm1023 = vcmp.lt.s32.totalorder %v791, 0
        %vm1024 = vcmp.lt.s32.totalorder %v798, 0
        %vm1025 = vcmp.lt.s32.totalorder %v805, 0
        %vm1026 = vcmp.lt.s32.totalorder %v812, 0
        %vm1027 = vcmp.lt.s32.totalorder %v819, 0
        %vm1028 = vcmp.lt.s32.totalorder %v826, 0
        %vm1029 = vcmp.lt.s32.totalorder %v833, 0
        %vm1030 = vcmp.lt.s32.totalorder %v840, 0
        %vm1031 = vcmp.lt.s32.totalorder %v847, 0
        %vm1032 = vcmp.lt.s32.totalorder %v854, 0
        %vm1033 = vcmp.lt.s32.totalorder %v861, 0
        %vm1034 = vcmp.lt.s32.totalorder %v868, 0
        %vm1035 = vcmp.lt.s32.totalorder %v875, 0
        %vm1036 = vcmp.lt.s32.totalorder %v882, 0
        %vm1037 = vcmp.lt.s32.totalorder %v889, 0
        %vm1038 = vcmp.lt.s32.totalorder %v896, 0
        %vm1039 = vcmp.lt.s32.totalorder %v903, 0
        %vm1040 = vcmp.lt.s32.totalorder %v910, 0
        %vm1041 = vcmp.lt.s32.totalorder %v917, 0
        %vm1042 = vcmp.lt.s32.totalorder %v924, 0
        %vm1043 = vcmp.lt.s32.totalorder %v931, 0
        %vm1044 = vcmp.lt.s32.totalorder %v938, 0
        %vm1045 = vcmp.lt.s32.totalorder %v945, 0
        %vm1046 = vcmp.lt.s32.totalorder %v952, 0
        %vm1047 = vcmp.lt.s32.totalorder %v959, 0
        %vm1048 = vcmp.lt.s32.totalorder %v966, 0
        %vm1049 = vcmp.lt.s32.totalorder %v973, 0
        %vm1050 = vcmp.lt.s32.totalorder %v980, 0
        %vm1051 = vcmp.lt.s32.totalorder %v987, 0
        %vm1052 = vmand %vm1020, %vm988
        %vm1053 = vmand %vm1021, %vm989
        %vm1054 = vmand %vm1022, %vm990
        %vm1055 = vmand %vm1023, %vm991
        %vm1056 = vmand %vm1024, %vm992
        %vm1057 = vmand %vm1025, %vm993
        %vm1058 = vmand %vm1026, %vm994
        %vm1059 = vmand %vm1027, %vm995
        %vm1060 = vmand %vm1028, %vm996
        %vm1061 = vmand %vm1029, %vm997
        %vm1062 = vmand %vm1030, %vm998
        %vm1063 = vmand %vm1031, %vm999
        %vm1064 = vmand %vm1032, %vm1000
        %vm1065 = vmand %vm1033, %vm1001
        %vm1066 = vmand %vm1034, %vm1002
        %vm1067 = vmand %vm1035, %vm1003
        %vm1068 = vmand %vm1036, %vm1004
        %vm1069 = vmand %vm1037, %vm1005
        %vm1070 = vmand %vm1038, %vm1006
        %vm1071 = vmand %vm1039, %vm1007
        %vm1072 = vmand %vm1040, %vm1008
        %vm1073 = vmand %vm1041, %vm1009
        %vm1074 = vmand %vm1042, %vm1010
        %vm1075 = vmand %vm1043, %vm1011
        %vm1076 = vmand %vm1044, %vm1012
        %vm1077 = vmand %vm1045, %vm1013
        %vm1078 = vmand %vm1046, %vm1014
        %vm1079 = vmand %vm1047, %vm1015
        %vm1080 = vmand %vm1048, %vm1016
        %vm1081 = vmand %vm1049, %vm1017
        %vm1082 = vmand %vm1050, %vm1018
        %vm1083 = vmand %vm1051, %vm1019
        %v1084 = vadd.s32 %v770, 16
        %v1085 = vadd.s32 %v777, 16
        %v1086 = vadd.s32 %v784, 16
        %v1087 = vadd.s32 %v791, 16
        %v1088 = vadd.s32 %v798, 16
        %v1089 = vadd.s32 %v805, 16
        %v1090 = vadd.s32 %v812, 16
        %v1091 = vadd.s32 %v819, 16
        %v1092 = vadd.s32 %v826, 16
        %v1093 = vadd.s32 %v833, 16
        %v1094 = vadd.s32 %v840, 16
        %v1095 = vadd.s32 %v847, 16
        %v1096 = vadd.s32 %v854, 16
        %v1097 = vadd.s32 %v861, 16
        %v1098 = vadd.s32 %v868, 16
        %v1099 = vadd.s32 %v875, 16
        %v1100 = vadd.s32 %v882, 16
        %v1101 = vadd.s32 %v889, 16
        %v1102 = vadd.s32 %v896, 16
        %v1103 = vadd.s32 %v903, 16
        %v1104 = vadd.s32 %v910, 16
        %v1105 = vadd.s32 %v917, 16
        %v1106 = vadd.s32 %v924, 16
        %v1107 = vadd.s32 %v931, 16
        %v1108 = vadd.s32 %v938, 16
        %v1109 = vadd.s32 %v945, 16
        %v1110 = vadd.s32 %v952, 16
        %v1111 = vadd.s32 %v959, 16
        %v1112 = vadd.s32 %v966, 16
        %v1113 = vadd.s32 %v973, 16
        %v1114 = vadd.s32 %v980, 16
        %v1115 = vadd.s32 %v987, 16
        %v1116 = vsel %vm1052, %v1084, %v770
        %v1117 = vsel %vm1053, %v1085, %v777
        %v1118 = vsel %vm1054, %v1086, %v784
        %v1119 = vsel %vm1055, %v1087, %v791
        %v1120 = vsel %vm1056, %v1088, %v798
        %v1121 = vsel %vm1057, %v1089, %v805
        %v1122 = vsel %vm1058, %v1090, %v812
        %v1123 = vsel %vm1059, %v1091, %v819
        %v1124 = vsel %vm1060, %v1092, %v826
        %v1125 = vsel %vm1061, %v1093, %v833
        %v1126 = vsel %vm1062, %v1094, %v840
        %v1127 = vsel %vm1063, %v1095, %v847
        %v1128 = vsel %vm1064, %v1096, %v854
        %v1129 = vsel %vm1065, %v1097, %v861
        %v1130 = vsel %vm1066, %v1098, %v868
        %v1131 = vsel %vm1067, %v1099, %v875
        %v1132 = vsel %vm1068, %v1100, %v882
        %v1133 = vsel %vm1069, %v1101, %v889
        %v1134 = vsel %vm1070, %v1102, %v896
        %v1135 = vsel %vm1071, %v1103, %v903
        %v1136 = vsel %vm1072, %v1104, %v910
        %v1137 = vsel %vm1073, %v1105, %v917
        %v1138 = vsel %vm1074, %v1106, %v924
        %v1139 = vsel %vm1075, %v1107, %v931
        %v1140 = vsel %vm1076, %v1108, %v938
        %v1141 = vsel %vm1077, %v1109, %v945
        %v1142 = vsel %vm1078, %v1110, %v952
        %v1143 = vsel %vm1079, %v1111, %v959
        %v1144 = vsel %vm1080, %v1112, %v966
        %v1145 = vsel %vm1081, %v1113, %v973
        %v1146 = vsel %vm1082, %v1114, %v980
        %v1147 = vsel %vm1083, %v1115, %v987
        %vm1148 = vcmp.ge.s32.totalorder %v1116, 1
        %vm1149 = vcmp.ge.s32.totalorder %v1117, 1
        %vm1150 = vcmp.ge.s32.totalorder %v1118, 1
        %vm1151 = vcmp.ge.s32.totalorder %v1119, 1
        %vm1152 = vcmp.ge.s32.totalorder %v1120, 1
        %vm1153 = vcmp.ge.s32.totalorder %v1121, 1
        %vm1154 = vcmp.ge.s32.totalorder %v1122, 1
        %vm1155 = vcmp.ge.s32.totalorder %v1123, 1
        %vm1156 = vcmp.ge.s32.totalorder %v1124, 1
        %vm1157 = vcmp.ge.s32.totalorder %v1125, 1
        %vm1158 = vcmp.ge.s32.totalorder %v1126, 1
        %vm1159 = vcmp.ge.s32.totalorder %v1127, 1
        %vm1160 = vcmp.ge.s32.totalorder %v1128, 1
        %vm1161 = vcmp.ge.s32.totalorder %v1129, 1
        %vm1162 = vcmp.ge.s32.totalorder %v1130, 1
        %vm1163 = vcmp.ge.s32.totalorder %v1131, 1
        %vm1164 = vcmp.ge.s32.totalorder %v1132, 1
        %vm1165 = vcmp.ge.s32.totalorder %v1133, 1
        %vm1166 = vcmp.ge.s32.totalorder %v1134, 1
        %vm1167 = vcmp.ge.s32.totalorder %v1135, 1
        %vm1168 = vcmp.ge.s32.totalorder %v1136, 1
        %vm1169 = vcmp.ge.s32.totalorder %v1137, 1
        %vm1170 = vcmp.ge.s32.totalorder %v1138, 1
        %vm1171 = vcmp.ge.s32.totalorder %v1139, 1
        %vm1172 = vcmp.ge.s32.totalorder %v1140, 1
        %vm1173 = vcmp.ge.s32.totalorder %v1141, 1
        %vm1174 = vcmp.ge.s32.totalorder %v1142, 1
        %vm1175 = vcmp.ge.s32.totalorder %v1143, 1
        %vm1176 = vcmp.ge.s32.totalorder %v1144, 1
        %vm1177 = vcmp.ge.s32.totalorder %v1145, 1
        %vm1178 = vcmp.ge.s32.totalorder %v1146, 1
        %vm1179 = vcmp.ge.s32.totalorder %v1147, 1
        %vm1180 = vcmp.le.s32.totalorder %v1116, 14
        %vm1181 = vcmp.le.s32.totalorder %v1117, 14
        %vm1182 = vcmp.le.s32.totalorder %v1118, 14
        %vm1183 = vcmp.le.s32.totalorder %v1119, 14
        %vm1184 = vcmp.le.s32.totalorder %v1120, 14
        %vm1185 = vcmp.le.s32.totalorder %v1121, 14
        %vm1186 = vcmp.le.s32.totalorder %v1122, 14
        %vm1187 = vcmp.le.s32.totalorder %v1123, 14
        %vm1188 = vcmp.le.s32.totalorder %v1124, 14
        %vm1189 = vcmp.le.s32.totalorder %v1125, 14
        %vm1190 = vcmp.le.s32.totalorder %v1126, 14
        %vm1191 = vcmp.le.s32.totalorder %v1127, 14
        %vm1192 = vcmp.le.s32.totalorder %v1128, 14
        %vm1193 = vcmp.le.s32.totalorder %v1129, 14
        %vm1194 = vcmp.le.s32.totalorder %v1130, 14
        %vm1195 = vcmp.le.s32.totalorder %v1131, 14
        %vm1196 = vcmp.le.s32.totalorder %v1132, 14
        %vm1197 = vcmp.le.s32.totalorder %v1133, 14
        %vm1198 = vcmp.le.s32.totalorder %v1134, 14
        %vm1199 = vcmp.le.s32.totalorder %v1135, 14
        %vm1200 = vcmp.le.s32.totalorder %v1136, 14
        %vm1201 = vcmp.le.s32.totalorder %v1137, 14
        %vm1202 = vcmp.le.s32.totalorder %v1138, 14
        %vm1203 = vcmp.le.s32.totalorder %v1139, 14
        %vm1204 = vcmp.le.s32.totalorder %v1140, 14
        %vm1205 = vcmp.le.s32.totalorder %v1141, 14
        %vm1206 = vcmp.le.s32.totalorder %v1142, 14
        %vm1207 = vcmp.le.s32.totalorder %v1143, 14
        %vm1208 = vcmp.le.s32.totalorder %v1144, 14
        %vm1209 = vcmp.le.s32.totalorder %v1145, 14
        %vm1210 = vcmp.le.s32.totalorder %v1146, 14
        %vm1211 = vcmp.le.s32.totalorder %v1147, 14
        %vm1212 = vcmp.ge.s32.totalorder %v732, 16
        %vm1213 = vcmp.ge.s32.totalorder %v733, 16
        %vm1214 = vcmp.ge.s32.totalorder %v734, 16
        %vm1215 = vcmp.ge.s32.totalorder %v735, 16
        %vm1216 = vcmp.ge.s32.totalorder %v736, 16
        %vm1217 = vcmp.ge.s32.totalorder %v737, 16
        %vm1218 = vcmp.ge.s32.totalorder %v738, 16
        %vm1219 = vcmp.ge.s32.totalorder %v739, 16
        %vm1220 = vcmp.ge.s32.totalorder %v740, 16
        %vm1221 = vcmp.ge.s32.totalorder %v741, 16
        %vm1222 = vcmp.ge.s32.totalorder %v742, 16
        %vm1223 = vcmp.ge.s32.totalorder %v743, 16
        %vm1224 = vcmp.ge.s32.totalorder %v744, 16
        %vm1225 = vcmp.ge.s32.totalorder %v745, 16
        %vm1226 = vcmp.ge.s32.totalorder %v746, 16
        %vm1227 = vcmp.ge.s32.totalorder %v747, 16
        %vm1228 = vcmp.ge.s32.totalorder %v748, 16
        %vm1229 = vcmp.ge.s32.totalorder %v749, 16
        %vm1230 = vcmp.ge.s32.totalorder %v750, 16
        %vm1231 = vcmp.ge.s32.totalorder %v751, 16
        %vm1232 = vcmp.ge.s32.totalorder %v752, 16
        %vm1233 = vcmp.ge.s32.totalorder %v753, 16
        %vm1234 = vcmp.ge.s32.totalorder %v754, 16
        %vm1235 = vcmp.ge.s32.totalorder %v755, 16
        %vm1236 = vcmp.ge.s32.totalorder %v756, 16
        %vm1237 = vcmp.ge.s32.totalorder %v757, 16
        %vm1238 = vcmp.ge.s32.totalorder %v758, 16
        %vm1239 = vcmp.ge.s32.totalorder %v759, 16
        %vm1240 = vcmp.ge.s32.totalorder %v760, 16
        %vm1241 = vcmp.ge.s32.totalorder %v761, 16
        %vm1242 = vcmp.ge.s32.totalorder %v762, 16
        %vm1243 = vcmp.ge.s32.totalorder %v763, 16
        %vm1244 = vcmp.lt.s32.totalorder %v732, 240
        %vm1245 = vcmp.lt.s32.totalorder %v733, 240
        %vm1246 = vcmp.lt.s32.totalorder %v734, 240
        %vm1247 = vcmp.lt.s32.totalorder %v735, 240
        %vm1248 = vcmp.lt.s32.totalorder %v736, 240
        %vm1249 = vcmp.lt.s32.totalorder %v737, 240
        %vm1250 = vcmp.lt.s32.totalorder %v738, 240
        %vm1251 = vcmp.lt.s32.totalorder %v739, 240
        %vm1252 = vcmp.lt.s32.totalorder %v740, 240
        %vm1253 = vcmp.lt.s32.totalorder %v741, 240
        %vm1254 = vcmp.lt.s32.totalorder %v742, 240
        %vm1255 = vcmp.lt.s32.totalorder %v743, 240
        %vm1256 = vcmp.lt.s32.totalorder %v744, 240
        %vm1257 = vcmp.lt.s32.totalorder %v745, 240
        %vm1258 = vcmp.lt.s32.totalorder %v746, 240
        %vm1259 = vcmp.lt.s32.totalorder %v747, 240
        %vm1260 = vcmp.lt.s32.totalorder %v748, 240
        %vm1261 = vcmp.lt.s32.totalorder %v749, 240
        %vm1262 = vcmp.lt.s32.totalorder %v750, 240
        %vm1263 = vcmp.lt.s32.totalorder %v751, 240
        %vm1264 = vcmp.lt.s32.totalorder %v752, 240
        %vm1265 = vcmp.lt.s32.totalorder %v753, 240
        %vm1266 = vcmp.lt.s32.totalorder %v754, 240
        %vm1267 = vcmp.lt.s32.totalorder %v755, 240
        %vm1268 = vcmp.lt.s32.totalorder %v756, 240
        %vm1269 = vcmp.lt.s32.totalorder %v757, 240
        %vm1270 = vcmp.lt.s32.totalorder %v758, 240
        %vm1271 = vcmp.lt.s32.totalorder %v759, 240
        %vm1272 = vcmp.lt.s32.totalorder %v760, 240
        %vm1273 = vcmp.lt.s32.totalorder %v761, 240
        %vm1274 = vcmp.lt.s32.totalorder %v762, 240
        %vm1275 = vcmp.lt.s32.totalorder %v763, 240
        %v1276 = vld [vmem:[%s3] sm:$0xff]
        %v1277 = vld [vmem:[%s3 + $0x8] sm:$0x1]
        %v1278 = vrot.slane %v699, 7
        %v1279 = vrot.slane %v700, 7
        %v1280 = vrot.slane %v701, 7
        %v1281 = vrot.slane %v702, 7
        %v1282 = vrot.slane %v703, 7
        %v1283 = vrot.slane %v704, 7
        %v1284 = vrot.slane %v705, 7
        %v1285 = vrot.slane %v706, 7
        %v1286 = vrot.slane %v707, 7
        %v1287 = vrot.slane %v708, 7
        %v1288 = vrot.slane %v709, 7
        %v1289 = vrot.slane %v710, 7
        %v1290 = vrot.slane %v711, 7
        %v1291 = vrot.slane %v712, 7
        %v1292 = vrot.slane %v713, 7
        %v1293 = vrot.slane %v714, 7
        %v1294 = vrot.slane %v715, 7
        %v1295 = vrot.slane %v716, 7
        %v1296 = vrot.slane %v717, 7
        %v1297 = vrot.slane %v718, 7
        %v1298 = vrot.slane %v719, 7
        %v1299 = vrot.slane %v720, 7
        %v1300 = vrot.slane %v721, 7
        %v1301 = vrot.slane %v722, 7
        %v1302 = vrot.slane %v723, 7
        %v1303 = vrot.slane %v724, 7
        %v1304 = vrot.slane %v725, 7
        %v1305 = vrot.slane %v726, 7
        %v1306 = vrot.slane %v727, 7
        %v1307 = vrot.slane %v728, 7
        %v1308 = vrot.slane %v729, 7
        %v1309 = vrot.slane %v730, 7
        %vm1310 = vcmp.lt.s32.totalorder %v732, 1
        %v1311 = vsel %vm1310, %v1308, %v1309
        %v1312 = vsel %vm1310, %v1307, %v1308
        %v1313 = vsel %vm1310, %v1306, %v1307
        %v1314 = vsel %vm1310, %v1305, %v1306
        %v1315 = vsel %vm1310, %v1304, %v1305
        %v1316 = vsel %vm1310, %v1303, %v1304
        %v1317 = vsel %vm1310, %v1302, %v1303
        %v1318 = vsel %vm1310, %v1301, %v1302
        %v1319 = vsel %vm1310, %v1300, %v1301
        %v1320 = vsel %vm1310, %v1299, %v1300
        %v1321 = vsel %vm1310, %v1298, %v1299
        %v1322 = vsel %vm1310, %v1297, %v1298
        %v1323 = vsel %vm1310, %v1296, %v1297
        %v1324 = vsel %vm1310, %v1295, %v1296
        %v1325 = vsel %vm1310, %v1294, %v1295
        %v1326 = vsel %vm1310, %v1293, %v1294
        %v1327 = vsel %vm1310, %v1292, %v1293
        %v1328 = vsel %vm1310, %v1291, %v1292
        %v1329 = vsel %vm1310, %v1290, %v1291
        %v1330 = vsel %vm1310, %v1289, %v1290
        %v1331 = vsel %vm1310, %v1288, %v1289
        %v1332 = vsel %vm1310, %v1287, %v1288
        %v1333 = vsel %vm1310, %v1286, %v1287
        %v1334 = vsel %vm1310, %v1285, %v1286
        %v1335 = vsel %vm1310, %v1284, %v1285
        %v1336 = vsel %vm1310, %v1283, %v1284
        %v1337 = vsel %vm1310, %v1282, %v1283
        %v1338 = vsel %vm1310, %v1281, %v1282
        %v1339 = vsel %vm1310, %v1280, %v1281
        %v1340 = vsel %vm1310, %v1279, %v1280
        %v1341 = vsel %vm1310, %v1278, %v1279
        %v1342 = vsel %vm1310, %v1309, %v1278
        %v1343 = vsel %vm1148, %v1342, 0.0
        %v1344 = vsel %vm1149, %v1341, 0.0
        %v1345 = vsel %vm1150, %v1340, 0.0
        %v1346 = vsel %vm1151, %v1339, 0.0
        %v1347 = vsel %vm1152, %v1338, 0.0
        %v1348 = vsel %vm1153, %v1337, 0.0
        %v1349 = vsel %vm1154, %v1336, 0.0
        %v1350 = vsel %vm1155, %v1335, 0.0
        %v1351 = vsel %vm1156, %v1334, 0.0
        %v1352 = vsel %vm1157, %v1333, 0.0
        %v1353 = vsel %vm1158, %v1332, 0.0
        %v1354 = vsel %vm1159, %v1331, 0.0
        %v1355 = vsel %vm1160, %v1330, 0.0
        %v1356 = vsel %vm1161, %v1329, 0.0
        %v1357 = vsel %vm1162, %v1328, 0.0
        %v1358 = vsel %vm1163, %v1327, 0.0
        %v1359 = vsel %vm1164, %v1326, 0.0
        %v1360 = vsel %vm1165, %v1325, 0.0
        %v1361 = vsel %vm1166, %v1324, 0.0
        %v1362 = vsel %vm1167, %v1323, 0.0
        %v1363 = vsel %vm1168, %v1322, 0.0
        %v1364 = vsel %vm1169, %v1321, 0.0
        %v1365 = vsel %vm1170, %v1320, 0.0
        %v1366 = vsel %vm1171, %v1319, 0.0
        %v1367 = vsel %vm1172, %v1318, 0.0
        %v1368 = vsel %vm1173, %v1317, 0.0
        %v1369 = vsel %vm1174, %v1316, 0.0
        %v1370 = vsel %vm1175, %v1315, 0.0
        %v1371 = vsel %vm1176, %v1314, 0.0
        %v1372 = vsel %vm1177, %v1313, 0.0
        %v1373 = vsel %vm1178, %v1312, 0.0
        %v1374 = vsel %vm1179, %v1311, 0.0
        %v1375 = vrot.slane %v699, 1
        %v1376 = vrot.slane %v700, 1
        %v1377 = vrot.slane %v701, 1
        %v1378 = vrot.slane %v702, 1
        %v1379 = vrot.slane %v703, 1
        %v1380 = vrot.slane %v704, 1
        %v1381 = vrot.slane %v705, 1
        %v1382 = vrot.slane %v706, 1
        %v1383 = vrot.slane %v707, 1
        %v1384 = vrot.slane %v708, 1
        %v1385 = vrot.slane %v709, 1
        %v1386 = vrot.slane %v710, 1
        %v1387 = vrot.slane %v711, 1
        %v1388 = vrot.slane %v712, 1
        %v1389 = vrot.slane %v713, 1
        %v1390 = vrot.slane %v714, 1
        %v1391 = vrot.slane %v715, 1
        %v1392 = vrot.slane %v716, 1
        %v1393 = vrot.slane %v717, 1
        %v1394 = vrot.slane %v718, 1
        %v1395 = vrot.slane %v719, 1
        %v1396 = vrot.slane %v720, 1
        %v1397 = vrot.slane %v721, 1
        %v1398 = vrot.slane %v722, 1
        %v1399 = vrot.slane %v723, 1
        %v1400 = vrot.slane %v724, 1
        %v1401 = vrot.slane %v725, 1
        %v1402 = vrot.slane %v726, 1
        %v1403 = vrot.slane %v727, 1
        %v1404 = vrot.slane %v728, 1
        %v1405 = vrot.slane %v729, 1
        %v1406 = vrot.slane %v730, 1
        %vm1407 = vcmp.lt.s32.totalorder %v732, 7
        %v1408 = vsel %vm1407, %v1405, %v1406
        %v1409 = vsel %vm1407, %v1404, %v1405
        %v1410 = vsel %vm1407, %v1403, %v1404
        %v1411 = vsel %vm1407, %v1402, %v1403
        %v1412 = vsel %vm1407, %v1401, %v1402
        %v1413 = vsel %vm1407, %v1400, %v1401
        %v1414 = vsel %vm1407, %v1399, %v1400
        %v1415 = vsel %vm1407, %v1398, %v1399
        %v1416 = vsel %vm1407, %v1397, %v1398
        %v1417 = vsel %vm1407, %v1396, %v1397
        %v1418 = vsel %vm1407, %v1395, %v1396
        %v1419 = vsel %vm1407, %v1394, %v1395
        %v1420 = vsel %vm1407, %v1393, %v1394
        %v1421 = vsel %vm1407, %v1392, %v1393
        %v1422 = vsel %vm1407, %v1391, %v1392
        %v1423 = vsel %vm1407, %v1390, %v1391
        %v1424 = vsel %vm1407, %v1389, %v1390
        %v1425 = vsel %vm1407, %v1388, %v1389
        %v1426 = vsel %vm1407, %v1387, %v1388
        %v1427 = vsel %vm1407, %v1386, %v1387
        %v1428 = vsel %vm1407, %v1385, %v1386
        %v1429 = vsel %vm1407, %v1384, %v1385
        %v1430 = vsel %vm1407, %v1383, %v1384
        %v1431 = vsel %vm1407, %v1382, %v1383
        %v1432 = vsel %vm1407, %v1381, %v1382
        %v1433 = vsel %vm1407, %v1380, %v1381
        %v1434 = vsel %vm1407, %v1379, %v1380
        %v1435 = vsel %vm1407, %v1378, %v1379
        %v1436 = vsel %vm1407, %v1377, %v1378
        %v1437 = vsel %vm1407, %v1376, %v1377
        %v1438 = vsel %vm1407, %v1375, %v1376
        %v1439 = vsel %vm1407, %v1406, %v1375
        %v1440 = vsel %vm1180, %v1438, 0.0
        %v1441 = vsel %vm1181, %v1437, 0.0
        %v1442 = vsel %vm1182, %v1436, 0.0
        %v1443 = vsel %vm1183, %v1435, 0.0
        %v1444 = vsel %vm1184, %v1434, 0.0
        %v1445 = vsel %vm1185, %v1433, 0.0
        %v1446 = vsel %vm1186, %v1432, 0.0
        %v1447 = vsel %vm1187, %v1431, 0.0
        %v1448 = vsel %vm1188, %v1430, 0.0
        %v1449 = vsel %vm1189, %v1429, 0.0
        %v1450 = vsel %vm1190, %v1428, 0.0
        %v1451 = vsel %vm1191, %v1427, 0.0
        %v1452 = vsel %vm1192, %v1426, 0.0
        %v1453 = vsel %vm1193, %v1425, 0.0
        %v1454 = vsel %vm1194, %v1424, 0.0
        %v1455 = vsel %vm1195, %v1423, 0.0
        %v1456 = vsel %vm1196, %v1422, 0.0
        %v1457 = vsel %vm1197, %v1421, 0.0
        %v1458 = vsel %vm1198, %v1420, 0.0
        %v1459 = vsel %vm1199, %v1419, 0.0
        %v1460 = vsel %vm1200, %v1418, 0.0
        %v1461 = vsel %vm1201, %v1417, 0.0
        %v1462 = vsel %vm1202, %v1416, 0.0
        %v1463 = vsel %vm1203, %v1415, 0.0
        %v1464 = vsel %vm1204, %v1414, 0.0
        %v1465 = vsel %vm1205, %v1413, 0.0
        %v1466 = vsel %vm1206, %v1412, 0.0
        %v1467 = vsel %vm1207, %v1411, 0.0
        %v1468 = vsel %vm1208, %v1410, 0.0
        %v1469 = vsel %vm1209, %v1409, 0.0
        %v1470 = vsel %vm1210, %v1408, 0.0
        %v1471 = vsel %vm1211, %v1439, 0.0
        %v1472 = vlaneseq
        %v1473 = vshrl.u32 %v1472, 7
        %v1474 = vsub.s32 0, %v1473
        %v1475 = vrot.slane %v1276, %v1474
        %v1476 = vmul.f32 %v1343, %v1475
        %v1477 = vmul.f32 %v1344, %v1475
        %v1478 = vmul.f32 %v1345, %v1475
        %v1479 = vmul.f32 %v1346, %v1475
        %v1480 = vmul.f32 %v1347, %v1475
        %v1481 = vmul.f32 %v1348, %v1475
        %v1482 = vmul.f32 %v1349, %v1475
        %v1483 = vmul.f32 %v1350, %v1475
        %v1484 = vmul.f32 %v1351, %v1475
        %v1485 = vmul.f32 %v1352, %v1475
        %v1486 = vmul.f32 %v1353, %v1475
        %v1487 = vmul.f32 %v1354, %v1475
        %v1488 = vmul.f32 %v1355, %v1475
        %v1489 = vmul.f32 %v1356, %v1475
        %v1490 = vmul.f32 %v1357, %v1475
        %v1491 = vmul.f32 %v1358, %v1475
        %v1492 = vmul.f32 %v1359, %v1475
        %v1493 = vmul.f32 %v1360, %v1475
        %v1494 = vmul.f32 %v1361, %v1475
        %v1495 = vmul.f32 %v1362, %v1475
        %v1496 = vmul.f32 %v1363, %v1475
        %v1497 = vmul.f32 %v1364, %v1475
        %v1498 = vmul.f32 %v1365, %v1475
        %v1499 = vmul.f32 %v1366, %v1475
        %v1500 = vmul.f32 %v1367, %v1475
        %v1501 = vmul.f32 %v1368, %v1475
        %v1502 = vmul.f32 %v1369, %v1475
        %v1503 = vmul.f32 %v1370, %v1475
        %v1504 = vmul.f32 %v1371, %v1475
        %v1505 = vmul.f32 %v1372, %v1475
        %v1506 = vmul.f32 %v1373, %v1475
        %v1507 = vmul.f32 %v1374, %v1475
        %v1508 = vlaneseq
        %v1509 = vshrl.u32 %v1508, 7
        %v1510 = vsub.s32 1, %v1509
        %v1511 = vrot.slane %v1276, %v1510
        %v1512 = vmul.f32 %v699, %v1511
        %v1513 = vmul.f32 %v700, %v1511
        %v1514 = vmul.f32 %v701, %v1511
        %v1515 = vmul.f32 %v702, %v1511
        %v1516 = vmul.f32 %v703, %v1511
        %v1517 = vmul.f32 %v704, %v1511
        %v1518 = vmul.f32 %v705, %v1511
        %v1519 = vmul.f32 %v706, %v1511
        %v1520 = vmul.f32 %v707, %v1511
        %v1521 = vmul.f32 %v708, %v1511
        %v1522 = vmul.f32 %v709, %v1511
        %v1523 = vmul.f32 %v710, %v1511
        %v1524 = vmul.f32 %v711, %v1511
        %v1525 = vmul.f32 %v712, %v1511
        %v1526 = vmul.f32 %v713, %v1511
        %v1527 = vmul.f32 %v714, %v1511
        %v1528 = vmul.f32 %v715, %v1511
        %v1529 = vmul.f32 %v716, %v1511
        %v1530 = vmul.f32 %v717, %v1511
        %v1531 = vmul.f32 %v718, %v1511
        %v1532 = vmul.f32 %v719, %v1511
        %v1533 = vmul.f32 %v720, %v1511
        %v1534 = vmul.f32 %v721, %v1511
        %v1535 = vmul.f32 %v722, %v1511
        %v1536 = vmul.f32 %v723, %v1511
        %v1537 = vmul.f32 %v724, %v1511
        %v1538 = vmul.f32 %v725, %v1511
        %v1539 = vmul.f32 %v726, %v1511
        %v1540 = vmul.f32 %v727, %v1511
        %v1541 = vmul.f32 %v728, %v1511
        %v1542 = vmul.f32 %v729, %v1511
        %v1543 = vmul.f32 %v730, %v1511
        %v1544 = vadd.f32 %v1476, %v1512
        %v1545 = vadd.f32 %v1477, %v1513
        %v1546 = vadd.f32 %v1478, %v1514
        %v1547 = vadd.f32 %v1479, %v1515
        %v1548 = vadd.f32 %v1480, %v1516
        %v1549 = vadd.f32 %v1481, %v1517
        %v1550 = vadd.f32 %v1482, %v1518
        %v1551 = vadd.f32 %v1483, %v1519
        %v1552 = vadd.f32 %v1484, %v1520
        %v1553 = vadd.f32 %v1485, %v1521
        %v1554 = vadd.f32 %v1486, %v1522
        %v1555 = vadd.f32 %v1487, %v1523
        %v1556 = vadd.f32 %v1488, %v1524
        %v1557 = vadd.f32 %v1489, %v1525
        %v1558 = vadd.f32 %v1490, %v1526
        %v1559 = vadd.f32 %v1491, %v1527
        %v1560 = vadd.f32 %v1492, %v1528
        %v1561 = vadd.f32 %v1493, %v1529
        %v1562 = vadd.f32 %v1494, %v1530
        %v1563 = vadd.f32 %v1495, %v1531
        %v1564 = vadd.f32 %v1496, %v1532
        %v1565 = vadd.f32 %v1497, %v1533
        %v1566 = vadd.f32 %v1498, %v1534
        %v1567 = vadd.f32 %v1499, %v1535
        %v1568 = vadd.f32 %v1500, %v1536
        %v1569 = vadd.f32 %v1501, %v1537
        %v1570 = vadd.f32 %v1502, %v1538
        %v1571 = vadd.f32 %v1503, %v1539
        %v1572 = vadd.f32 %v1504, %v1540
        %v1573 = vadd.f32 %v1505, %v1541
        %v1574 = vadd.f32 %v1506, %v1542
        %v1575 = vadd.f32 %v1507, %v1543
        %v1576 = vlaneseq
        %v1577 = vshrl.u32 %v1576, 7
        %v1578 = vsub.s32 2, %v1577
        %v1579 = vrot.slane %v1276, %v1578
        %v1580 = vmul.f32 %v1440, %v1579
        %v1581 = vmul.f32 %v1441, %v1579
        %v1582 = vmul.f32 %v1442, %v1579
        %v1583 = vmul.f32 %v1443, %v1579
        %v1584 = vmul.f32 %v1444, %v1579
        %v1585 = vmul.f32 %v1445, %v1579
        %v1586 = vmul.f32 %v1446, %v1579
        %v1587 = vmul.f32 %v1447, %v1579
        %v1588 = vmul.f32 %v1448, %v1579
        %v1589 = vmul.f32 %v1449, %v1579
        %v1590 = vmul.f32 %v1450, %v1579
        %v1591 = vmul.f32 %v1451, %v1579
        %v1592 = vmul.f32 %v1452, %v1579
        %v1593 = vmul.f32 %v1453, %v1579
        %v1594 = vmul.f32 %v1454, %v1579
        %v1595 = vmul.f32 %v1455, %v1579
        %v1596 = vmul.f32 %v1456, %v1579
        %v1597 = vmul.f32 %v1457, %v1579
        %v1598 = vmul.f32 %v1458, %v1579
        %v1599 = vmul.f32 %v1459, %v1579
        %v1600 = vmul.f32 %v1460, %v1579
        %v1601 = vmul.f32 %v1461, %v1579
        %v1602 = vmul.f32 %v1462, %v1579
        %v1603 = vmul.f32 %v1463, %v1579
        %v1604 = vmul.f32 %v1464, %v1579
        %v1605 = vmul.f32 %v1465, %v1579
        %v1606 = vmul.f32 %v1466, %v1579
        %v1607 = vmul.f32 %v1467, %v1579
        %v1608 = vmul.f32 %v1468, %v1579
        %v1609 = vmul.f32 %v1469, %v1579
        %v1610 = vmul.f32 %v1470, %v1579
        %v1611 = vmul.f32 %v1471, %v1579
        %v1612 = vadd.f32 %v1544, %v1580
        %v1613 = vadd.f32 %v1545, %v1581
        %v1614 = vadd.f32 %v1546, %v1582
        %v1615 = vadd.f32 %v1547, %v1583
        %v1616 = vadd.f32 %v1548, %v1584
        %v1617 = vadd.f32 %v1549, %v1585
        %v1618 = vadd.f32 %v1550, %v1586
        %v1619 = vadd.f32 %v1551, %v1587
        %v1620 = vadd.f32 %v1552, %v1588
        %v1621 = vadd.f32 %v1553, %v1589
        %v1622 = vadd.f32 %v1554, %v1590
        %v1623 = vadd.f32 %v1555, %v1591
        %v1624 = vadd.f32 %v1556, %v1592
        %v1625 = vadd.f32 %v1557, %v1593
        %v1626 = vadd.f32 %v1558, %v1594
        %v1627 = vadd.f32 %v1559, %v1595
        %v1628 = vadd.f32 %v1560, %v1596
        %v1629 = vadd.f32 %v1561, %v1597
        %v1630 = vadd.f32 %v1562, %v1598
        %v1631 = vadd.f32 %v1563, %v1599
        %v1632 = vadd.f32 %v1564, %v1600
        %v1633 = vadd.f32 %v1565, %v1601
        %v1634 = vadd.f32 %v1566, %v1602
        %v1635 = vadd.f32 %v1567, %v1603
        %v1636 = vadd.f32 %v1568, %v1604
        %v1637 = vadd.f32 %v1569, %v1605
        %v1638 = vadd.f32 %v1570, %v1606
        %v1639 = vadd.f32 %v1571, %v1607
        %v1640 = vadd.f32 %v1572, %v1608
        %v1641 = vadd.f32 %v1573, %v1609
        %v1642 = vadd.f32 %v1574, %v1610
        %v1643 = vadd.f32 %v1575, %v1611
        %v1644 = vsel %vm1212, %v1642, 0.0
        %v1645 = vsel %vm1213, %v1643, 0.0
        %v1646 = vsel %vm1214, %v1612, 0.0
        %v1647 = vsel %vm1215, %v1613, 0.0
        %v1648 = vsel %vm1216, %v1614, 0.0
        %v1649 = vsel %vm1217, %v1615, 0.0
        %v1650 = vsel %vm1218, %v1616, 0.0
        %v1651 = vsel %vm1219, %v1617, 0.0
        %v1652 = vsel %vm1220, %v1618, 0.0
        %v1653 = vsel %vm1221, %v1619, 0.0
        %v1654 = vsel %vm1222, %v1620, 0.0
        %v1655 = vsel %vm1223, %v1621, 0.0
        %v1656 = vsel %vm1224, %v1622, 0.0
        %v1657 = vsel %vm1225, %v1623, 0.0
        %v1658 = vsel %vm1226, %v1624, 0.0
        %v1659 = vsel %vm1227, %v1625, 0.0
        %v1660 = vsel %vm1228, %v1626, 0.0
        %v1661 = vsel %vm1229, %v1627, 0.0
        %v1662 = vsel %vm1230, %v1628, 0.0
        %v1663 = vsel %vm1231, %v1629, 0.0
        %v1664 = vsel %vm1232, %v1630, 0.0
        %v1665 = vsel %vm1233, %v1631, 0.0
        %v1666 = vsel %vm1234, %v1632, 0.0
        %v1667 = vsel %vm1235, %v1633, 0.0
        %v1668 = vsel %vm1236, %v1634, 0.0
        %v1669 = vsel %vm1237, %v1635, 0.0
        %v1670 = vsel %vm1238, %v1636, 0.0
        %v1671 = vsel %vm1239, %v1637, 0.0
        %v1672 = vsel %vm1240, %v1638, 0.0
        %v1673 = vsel %vm1241, %v1639, 0.0
        %v1674 = vsel %vm1242, %v1640, 0.0
        %v1675 = vsel %vm1243, %v1641, 0.0
        %v1676 = vadd.f32 %v1644, 0.0
        %v1677 = vadd.f32 %v1645, 0.0
        %v1678 = vadd.f32 %v1646, 0.0
        %v1679 = vadd.f32 %v1647, 0.0
        %v1680 = vadd.f32 %v1648, 0.0
        %v1681 = vadd.f32 %v1649, 0.0
        %v1682 = vadd.f32 %v1650, 0.0
        %v1683 = vadd.f32 %v1651, 0.0
        %v1684 = vadd.f32 %v1652, 0.0
        %v1685 = vadd.f32 %v1653, 0.0
        %v1686 = vadd.f32 %v1654, 0.0
        %v1687 = vadd.f32 %v1655, 0.0
        %v1688 = vadd.f32 %v1656, 0.0
        %v1689 = vadd.f32 %v1657, 0.0
        %v1690 = vadd.f32 %v1658, 0.0
        %v1691 = vadd.f32 %v1659, 0.0
        %v1692 = vadd.f32 %v1660, 0.0
        %v1693 = vadd.f32 %v1661, 0.0
        %v1694 = vadd.f32 %v1662, 0.0
        %v1695 = vadd.f32 %v1663, 0.0
        %v1696 = vadd.f32 %v1664, 0.0
        %v1697 = vadd.f32 %v1665, 0.0
        %v1698 = vadd.f32 %v1666, 0.0
        %v1699 = vadd.f32 %v1667, 0.0
        %v1700 = vadd.f32 %v1668, 0.0
        %v1701 = vadd.f32 %v1669, 0.0
        %v1702 = vadd.f32 %v1670, 0.0
        %v1703 = vadd.f32 %v1671, 0.0
        %v1704 = vadd.f32 %v1672, 0.0
        %v1705 = vadd.f32 %v1673, 0.0
        %v1706 = vadd.f32 %v1674, 0.0
        %v1707 = vadd.f32 %v1675, 0.0
        %v1708 = vlaneseq
        %v1709 = vshrl.u32 %v1708, 7
        %v1710 = vsub.s32 3, %v1709
        %v1711 = vrot.slane %v1276, %v1710
        %v1712 = vmul.f32 %v1343, %v1711
        %v1713 = vmul.f32 %v1344, %v1711
        %v1714 = vmul.f32 %v1345, %v1711
        %v1715 = vmul.f32 %v1346, %v1711
        %v1716 = vmul.f32 %v1347, %v1711
        %v1717 = vmul.f32 %v1348, %v1711
        %v1718 = vmul.f32 %v1349, %v1711
        %v1719 = vmul.f32 %v1350, %v1711
        %v1720 = vmul.f32 %v1351, %v1711
        %v1721 = vmul.f32 %v1352, %v1711
        %v1722 = vmul.f32 %v1353, %v1711
        %v1723 = vmul.f32 %v1354, %v1711
        %v1724 = vmul.f32 %v1355, %v1711
        %v1725 = vmul.f32 %v1356, %v1711
        %v1726 = vmul.f32 %v1357, %v1711
        %v1727 = vmul.f32 %v1358, %v1711
        %v1728 = vmul.f32 %v1359, %v1711
        %v1729 = vmul.f32 %v1360, %v1711
        %v1730 = vmul.f32 %v1361, %v1711
        %v1731 = vmul.f32 %v1362, %v1711
        %v1732 = vmul.f32 %v1363, %v1711
        %v1733 = vmul.f32 %v1364, %v1711
        %v1734 = vmul.f32 %v1365, %v1711
        %v1735 = vmul.f32 %v1366, %v1711
        %v1736 = vmul.f32 %v1367, %v1711
        %v1737 = vmul.f32 %v1368, %v1711
        %v1738 = vmul.f32 %v1369, %v1711
        %v1739 = vmul.f32 %v1370, %v1711
        %v1740 = vmul.f32 %v1371, %v1711
        %v1741 = vmul.f32 %v1372, %v1711
        %v1742 = vmul.f32 %v1373, %v1711
        %v1743 = vmul.f32 %v1374, %v1711
        %v1744 = vlaneseq
        %v1745 = vshrl.u32 %v1744, 7
        %v1746 = vsub.s32 4, %v1745
        %v1747 = vrot.slane %v1276, %v1746
        %v1748 = vmul.f32 %v699, %v1747
        %v1749 = vmul.f32 %v700, %v1747
        %v1750 = vmul.f32 %v701, %v1747
        %v1751 = vmul.f32 %v702, %v1747
        %v1752 = vmul.f32 %v703, %v1747
        %v1753 = vmul.f32 %v704, %v1747
        %v1754 = vmul.f32 %v705, %v1747
        %v1755 = vmul.f32 %v706, %v1747
        %v1756 = vmul.f32 %v707, %v1747
        %v1757 = vmul.f32 %v708, %v1747
        %v1758 = vmul.f32 %v709, %v1747
        %v1759 = vmul.f32 %v710, %v1747
        %v1760 = vmul.f32 %v711, %v1747
        %v1761 = vmul.f32 %v712, %v1747
        %v1762 = vmul.f32 %v713, %v1747
        %v1763 = vmul.f32 %v714, %v1747
        %v1764 = vmul.f32 %v715, %v1747
        %v1765 = vmul.f32 %v716, %v1747
        %v1766 = vmul.f32 %v717, %v1747
        %v1767 = vmul.f32 %v718, %v1747
        %v1768 = vmul.f32 %v719, %v1747
        %v1769 = vmul.f32 %v720, %v1747
        %v1770 = vmul.f32 %v721, %v1747
        %v1771 = vmul.f32 %v722, %v1747
        %v1772 = vmul.f32 %v723, %v1747
        %v1773 = vmul.f32 %v724, %v1747
        %v1774 = vmul.f32 %v725, %v1747
        %v1775 = vmul.f32 %v726, %v1747
        %v1776 = vmul.f32 %v727, %v1747
        %v1777 = vmul.f32 %v728, %v1747
        %v1778 = vmul.f32 %v729, %v1747
        %v1779 = vmul.f32 %v730, %v1747
        %v1780 = vadd.f32 %v1712, %v1748
        %v1781 = vadd.f32 %v1713, %v1749
        %v1782 = vadd.f32 %v1714, %v1750
        %v1783 = vadd.f32 %v1715, %v1751
        %v1784 = vadd.f32 %v1716, %v1752
        %v1785 = vadd.f32 %v1717, %v1753
        %v1786 = vadd.f32 %v1718, %v1754
        %v1787 = vadd.f32 %v1719, %v1755
        %v1788 = vadd.f32 %v1720, %v1756
        %v1789 = vadd.f32 %v1721, %v1757
        %v1790 = vadd.f32 %v1722, %v1758
        %v1791 = vadd.f32 %v1723, %v1759
        %v1792 = vadd.f32 %v1724, %v1760
        %v1793 = vadd.f32 %v1725, %v1761
        %v1794 = vadd.f32 %v1726, %v1762
        %v1795 = vadd.f32 %v1727, %v1763
        %v1796 = vadd.f32 %v1728, %v1764
        %v1797 = vadd.f32 %v1729, %v1765
        %v1798 = vadd.f32 %v1730, %v1766
        %v1799 = vadd.f32 %v1731, %v1767
        %v1800 = vadd.f32 %v1732, %v1768
        %v1801 = vadd.f32 %v1733, %v1769
        %v1802 = vadd.f32 %v1734, %v1770
        %v1803 = vadd.f32 %v1735, %v1771
        %v1804 = vadd.f32 %v1736, %v1772
        %v1805 = vadd.f32 %v1737, %v1773
        %v1806 = vadd.f32 %v1738, %v1774
        %v1807 = vadd.f32 %v1739, %v1775
        %v1808 = vadd.f32 %v1740, %v1776
        %v1809 = vadd.f32 %v1741, %v1777
        %v1810 = vadd.f32 %v1742, %v1778
        %v1811 = vadd.f32 %v1743, %v1779
        %v1812 = vlaneseq
        %v1813 = vshrl.u32 %v1812, 7
        %v1814 = vsub.s32 5, %v1813
        %v1815 = vrot.slane %v1276, %v1814
        %v1816 = vmul.f32 %v1440, %v1815
        %v1817 = vmul.f32 %v1441, %v1815
        %v1818 = vmul.f32 %v1442, %v1815
        %v1819 = vmul.f32 %v1443, %v1815
        %v1820 = vmul.f32 %v1444, %v1815
        %v1821 = vmul.f32 %v1445, %v1815
        %v1822 = vmul.f32 %v1446, %v1815
        %v1823 = vmul.f32 %v1447, %v1815
        %v1824 = vmul.f32 %v1448, %v1815
        %v1825 = vmul.f32 %v1449, %v1815
        %v1826 = vmul.f32 %v1450, %v1815
        %v1827 = vmul.f32 %v1451, %v1815
        %v1828 = vmul.f32 %v1452, %v1815
        %v1829 = vmul.f32 %v1453, %v1815
        %v1830 = vmul.f32 %v1454, %v1815
        %v1831 = vmul.f32 %v1455, %v1815
        %v1832 = vmul.f32 %v1456, %v1815
        %v1833 = vmul.f32 %v1457, %v1815
        %v1834 = vmul.f32 %v1458, %v1815
        %v1835 = vmul.f32 %v1459, %v1815
        %v1836 = vmul.f32 %v1460, %v1815
        %v1837 = vmul.f32 %v1461, %v1815
        %v1838 = vmul.f32 %v1462, %v1815
        %v1839 = vmul.f32 %v1463, %v1815
        %v1840 = vmul.f32 %v1464, %v1815
        %v1841 = vmul.f32 %v1465, %v1815
        %v1842 = vmul.f32 %v1466, %v1815
        %v1843 = vmul.f32 %v1467, %v1815
        %v1844 = vmul.f32 %v1468, %v1815
        %v1845 = vmul.f32 %v1469, %v1815
        %v1846 = vmul.f32 %v1470, %v1815
        %v1847 = vmul.f32 %v1471, %v1815
        %v1848 = vadd.f32 %v1780, %v1816
        %v1849 = vadd.f32 %v1781, %v1817
        %v1850 = vadd.f32 %v1782, %v1818
        %v1851 = vadd.f32 %v1783, %v1819
        %v1852 = vadd.f32 %v1784, %v1820
        %v1853 = vadd.f32 %v1785, %v1821
        %v1854 = vadd.f32 %v1786, %v1822
        %v1855 = vadd.f32 %v1787, %v1823
        %v1856 = vadd.f32 %v1788, %v1824
        %v1857 = vadd.f32 %v1789, %v1825
        %v1858 = vadd.f32 %v1790, %v1826
        %v1859 = vadd.f32 %v1791, %v1827
        %v1860 = vadd.f32 %v1792, %v1828
        %v1861 = vadd.f32 %v1793, %v1829
        %v1862 = vadd.f32 %v1794, %v1830
        %v1863 = vadd.f32 %v1795, %v1831
        %v1864 = vadd.f32 %v1796, %v1832
        %v1865 = vadd.f32 %v1797, %v1833
        %v1866 = vadd.f32 %v1798, %v1834
        %v1867 = vadd.f32 %v1799, %v1835
        %v1868 = vadd.f32 %v1800, %v1836
        %v1869 = vadd.f32 %v1801, %v1837
        %v1870 = vadd.f32 %v1802, %v1838
        %v1871 = vadd.f32 %v1803, %v1839
        %v1872 = vadd.f32 %v1804, %v1840
        %v1873 = vadd.f32 %v1805, %v1841
        %v1874 = vadd.f32 %v1806, %v1842
        %v1875 = vadd.f32 %v1807, %v1843
        %v1876 = vadd.f32 %v1808, %v1844
        %v1877 = vadd.f32 %v1809, %v1845
        %v1878 = vadd.f32 %v1810, %v1846
        %v1879 = vadd.f32 %v1811, %v1847
        %v1880 = vadd.f32 %v1676, %v1848
        %v1881 = vadd.f32 %v1677, %v1849
        %v1882 = vadd.f32 %v1678, %v1850
        %v1883 = vadd.f32 %v1679, %v1851
        %v1884 = vadd.f32 %v1680, %v1852
        %v1885 = vadd.f32 %v1681, %v1853
        %v1886 = vadd.f32 %v1682, %v1854
        %v1887 = vadd.f32 %v1683, %v1855
        %v1888 = vadd.f32 %v1684, %v1856
        %v1889 = vadd.f32 %v1685, %v1857
        %v1890 = vadd.f32 %v1686, %v1858
        %v1891 = vadd.f32 %v1687, %v1859
        %v1892 = vadd.f32 %v1688, %v1860
        %v1893 = vadd.f32 %v1689, %v1861
        %v1894 = vadd.f32 %v1690, %v1862
        %v1895 = vadd.f32 %v1691, %v1863
        %v1896 = vadd.f32 %v1692, %v1864
        %v1897 = vadd.f32 %v1693, %v1865
        %v1898 = vadd.f32 %v1694, %v1866
        %v1899 = vadd.f32 %v1695, %v1867
        %v1900 = vadd.f32 %v1696, %v1868
        %v1901 = vadd.f32 %v1697, %v1869
        %v1902 = vadd.f32 %v1698, %v1870
        %v1903 = vadd.f32 %v1699, %v1871
        %v1904 = vadd.f32 %v1700, %v1872
        %v1905 = vadd.f32 %v1701, %v1873
        %v1906 = vadd.f32 %v1702, %v1874
        %v1907 = vadd.f32 %v1703, %v1875
        %v1908 = vadd.f32 %v1704, %v1876
        %v1909 = vadd.f32 %v1705, %v1877
        %v1910 = vadd.f32 %v1706, %v1878
        %v1911 = vadd.f32 %v1707, %v1879
        %v1912 = vlaneseq
        %v1913 = vshrl.u32 %v1912, 7
        %v1914 = vsub.s32 6, %v1913
        %v1915 = vrot.slane %v1276, %v1914
        %v1916 = vmul.f32 %v1343, %v1915
        %v1917 = vmul.f32 %v1344, %v1915
        %v1918 = vmul.f32 %v1345, %v1915
        %v1919 = vmul.f32 %v1346, %v1915
        %v1920 = vmul.f32 %v1347, %v1915
        %v1921 = vmul.f32 %v1348, %v1915
        %v1922 = vmul.f32 %v1349, %v1915
        %v1923 = vmul.f32 %v1350, %v1915
        %v1924 = vmul.f32 %v1351, %v1915
        %v1925 = vmul.f32 %v1352, %v1915
        %v1926 = vmul.f32 %v1353, %v1915
        %v1927 = vmul.f32 %v1354, %v1915
        %v1928 = vmul.f32 %v1355, %v1915
        %v1929 = vmul.f32 %v1356, %v1915
        %v1930 = vmul.f32 %v1357, %v1915
        %v1931 = vmul.f32 %v1358, %v1915
        %v1932 = vmul.f32 %v1359, %v1915
        %v1933 = vmul.f32 %v1360, %v1915
        %v1934 = vmul.f32 %v1361, %v1915
        %v1935 = vmul.f32 %v1362, %v1915
        %v1936 = vmul.f32 %v1363, %v1915
        %v1937 = vmul.f32 %v1364, %v1915
        %v1938 = vmul.f32 %v1365, %v1915
        %v1939 = vmul.f32 %v1366, %v1915
        %v1940 = vmul.f32 %v1367, %v1915
        %v1941 = vmul.f32 %v1368, %v1915
        %v1942 = vmul.f32 %v1369, %v1915
        %v1943 = vmul.f32 %v1370, %v1915
        %v1944 = vmul.f32 %v1371, %v1915
        %v1945 = vmul.f32 %v1372, %v1915
        %v1946 = vmul.f32 %v1373, %v1915
        %v1947 = vmul.f32 %v1374, %v1915
        %v1948 = vlaneseq
        %v1949 = vshrl.u32 %v1948, 7
        %v1950 = vsub.s32 7, %v1949
        %v1951 = vrot.slane %v1276, %v1950
        %v1952 = vmul.f32 %v699, %v1951
        %v1953 = vmul.f32 %v700, %v1951
        %v1954 = vmul.f32 %v701, %v1951
        %v1955 = vmul.f32 %v702, %v1951
        %v1956 = vmul.f32 %v703, %v1951
        %v1957 = vmul.f32 %v704, %v1951
        %v1958 = vmul.f32 %v705, %v1951
        %v1959 = vmul.f32 %v706, %v1951
        %v1960 = vmul.f32 %v707, %v1951
        %v1961 = vmul.f32 %v708, %v1951
        %v1962 = vmul.f32 %v709, %v1951
        %v1963 = vmul.f32 %v710, %v1951
        %v1964 = vmul.f32 %v711, %v1951
        %v1965 = vmul.f32 %v712, %v1951
        %v1966 = vmul.f32 %v713, %v1951
        %v1967 = vmul.f32 %v714, %v1951
        %v1968 = vmul.f32 %v715, %v1951
        %v1969 = vmul.f32 %v716, %v1951
        %v1970 = vmul.f32 %v717, %v1951
        %v1971 = vmul.f32 %v718, %v1951
        %v1972 = vmul.f32 %v719, %v1951
        %v1973 = vmul.f32 %v720, %v1951
        %v1974 = vmul.f32 %v721, %v1951
        %v1975 = vmul.f32 %v722, %v1951
        %v1976 = vmul.f32 %v723, %v1951
        %v1977 = vmul.f32 %v724, %v1951
        %v1978 = vmul.f32 %v725, %v1951
        %v1979 = vmul.f32 %v726, %v1951
        %v1980 = vmul.f32 %v727, %v1951
        %v1981 = vmul.f32 %v728, %v1951
        %v1982 = vmul.f32 %v729, %v1951
        %v1983 = vmul.f32 %v730, %v1951
        %v1984 = vadd.f32 %v1916, %v1952
        %v1985 = vadd.f32 %v1917, %v1953
        %v1986 = vadd.f32 %v1918, %v1954
        %v1987 = vadd.f32 %v1919, %v1955
        %v1988 = vadd.f32 %v1920, %v1956
        %v1989 = vadd.f32 %v1921, %v1957
        %v1990 = vadd.f32 %v1922, %v1958
        %v1991 = vadd.f32 %v1923, %v1959
        %v1992 = vadd.f32 %v1924, %v1960
        %v1993 = vadd.f32 %v1925, %v1961
        %v1994 = vadd.f32 %v1926, %v1962
        %v1995 = vadd.f32 %v1927, %v1963
        %v1996 = vadd.f32 %v1928, %v1964
        %v1997 = vadd.f32 %v1929, %v1965
        %v1998 = vadd.f32 %v1930, %v1966
        %v1999 = vadd.f32 %v1931, %v1967
        %v2000 = vadd.f32 %v1932, %v1968
        %v2001 = vadd.f32 %v1933, %v1969
        %v2002 = vadd.f32 %v1934, %v1970
        %v2003 = vadd.f32 %v1935, %v1971
        %v2004 = vadd.f32 %v1936, %v1972
        %v2005 = vadd.f32 %v1937, %v1973
        %v2006 = vadd.f32 %v1938, %v1974
        %v2007 = vadd.f32 %v1939, %v1975
        %v2008 = vadd.f32 %v1940, %v1976
        %v2009 = vadd.f32 %v1941, %v1977
        %v2010 = vadd.f32 %v1942, %v1978
        %v2011 = vadd.f32 %v1943, %v1979
        %v2012 = vadd.f32 %v1944, %v1980
        %v2013 = vadd.f32 %v1945, %v1981
        %v2014 = vadd.f32 %v1946, %v1982
        %v2015 = vadd.f32 %v1947, %v1983
        %v2016 = vlaneseq
        %v2017 = vshrl.u32 %v2016, 7
        %v2018 = vsub.s32 0, %v2017
        %v2019 = vrot.slane %v1277, %v2018
        %v2020 = vmul.f32 %v1440, %v2019
        %v2021 = vmul.f32 %v1441, %v2019
        %v2022 = vmul.f32 %v1442, %v2019
        %v2023 = vmul.f32 %v1443, %v2019
        %v2024 = vmul.f32 %v1444, %v2019
        %v2025 = vmul.f32 %v1445, %v2019
        %v2026 = vmul.f32 %v1446, %v2019
        %v2027 = vmul.f32 %v1447, %v2019
        %v2028 = vmul.f32 %v1448, %v2019
        %v2029 = vmul.f32 %v1449, %v2019
        %v2030 = vmul.f32 %v1450, %v2019
        %v2031 = vmul.f32 %v1451, %v2019
        %v2032 = vmul.f32 %v1452, %v2019
        %v2033 = vmul.f32 %v1453, %v2019
        %v2034 = vmul.f32 %v1454, %v2019
        %v2035 = vmul.f32 %v1455, %v2019
        %v2036 = vmul.f32 %v1456, %v2019
        %v2037 = vmul.f32 %v1457, %v2019
        %v2038 = vmul.f32 %v1458, %v2019
        %v2039 = vmul.f32 %v1459, %v2019
        %v2040 = vmul.f32 %v1460, %v2019
        %v2041 = vmul.f32 %v1461, %v2019
        %v2042 = vmul.f32 %v1462, %v2019
        %v2043 = vmul.f32 %v1463, %v2019
        %v2044 = vmul.f32 %v1464, %v2019
        %v2045 = vmul.f32 %v1465, %v2019
        %v2046 = vmul.f32 %v1466, %v2019
        %v2047 = vmul.f32 %v1467, %v2019
        %v2048 = vmul.f32 %v1468, %v2019
        %v2049 = vmul.f32 %v1469, %v2019
        %v2050 = vmul.f32 %v1470, %v2019
        %v2051 = vmul.f32 %v1471, %v2019
        %v2052 = vadd.f32 %v1984, %v2020
        %v2053 = vadd.f32 %v1985, %v2021
        %v2054 = vadd.f32 %v1986, %v2022
        %v2055 = vadd.f32 %v1987, %v2023
        %v2056 = vadd.f32 %v1988, %v2024
        %v2057 = vadd.f32 %v1989, %v2025
        %v2058 = vadd.f32 %v1990, %v2026
        %v2059 = vadd.f32 %v1991, %v2027
        %v2060 = vadd.f32 %v1992, %v2028
        %v2061 = vadd.f32 %v1993, %v2029
        %v2062 = vadd.f32 %v1994, %v2030
        %v2063 = vadd.f32 %v1995, %v2031
        %v2064 = vadd.f32 %v1996, %v2032
        %v2065 = vadd.f32 %v1997, %v2033
        %v2066 = vadd.f32 %v1998, %v2034
        %v2067 = vadd.f32 %v1999, %v2035
        %v2068 = vadd.f32 %v2000, %v2036
        %v2069 = vadd.f32 %v2001, %v2037
        %v2070 = vadd.f32 %v2002, %v2038
        %v2071 = vadd.f32 %v2003, %v2039
        %v2072 = vadd.f32 %v2004, %v2040
        %v2073 = vadd.f32 %v2005, %v2041
        %v2074 = vadd.f32 %v2006, %v2042
        %v2075 = vadd.f32 %v2007, %v2043
        %v2076 = vadd.f32 %v2008, %v2044
        %v2077 = vadd.f32 %v2009, %v2045
        %v2078 = vadd.f32 %v2010, %v2046
        %v2079 = vadd.f32 %v2011, %v2047
        %v2080 = vadd.f32 %v2012, %v2048
        %v2081 = vadd.f32 %v2013, %v2049
        %v2082 = vadd.f32 %v2014, %v2050
        %v2083 = vadd.f32 %v2015, %v2051
        %v2084 = vsel %vm1244, %v2054, 0.0
        %v2085 = vsel %vm1245, %v2055, 0.0
        %v2086 = vsel %vm1246, %v2056, 0.0
        %v2087 = vsel %vm1247, %v2057, 0.0
        %v2088 = vsel %vm1248, %v2058, 0.0
        %v2089 = vsel %vm1249, %v2059, 0.0
        %v2090 = vsel %vm1250, %v2060, 0.0
        %v2091 = vsel %vm1251, %v2061, 0.0
        %v2092 = vsel %vm1252, %v2062, 0.0
        %v2093 = vsel %vm1253, %v2063, 0.0
        %v2094 = vsel %vm1254, %v2064, 0.0
        %v2095 = vsel %vm1255, %v2065, 0.0
        %v2096 = vsel %vm1256, %v2066, 0.0
        %v2097 = vsel %vm1257, %v2067, 0.0
        %v2098 = vsel %vm1258, %v2068, 0.0
        %v2099 = vsel %vm1259, %v2069, 0.0
        %v2100 = vsel %vm1260, %v2070, 0.0
        %v2101 = vsel %vm1261, %v2071, 0.0
        %v2102 = vsel %vm1262, %v2072, 0.0
        %v2103 = vsel %vm1263, %v2073, 0.0
        %v2104 = vsel %vm1264, %v2074, 0.0
        %v2105 = vsel %vm1265, %v2075, 0.0
        %v2106 = vsel %vm1266, %v2076, 0.0
        %v2107 = vsel %vm1267, %v2077, 0.0
        %v2108 = vsel %vm1268, %v2078, 0.0
        %v2109 = vsel %vm1269, %v2079, 0.0
        %v2110 = vsel %vm1270, %v2080, 0.0
        %v2111 = vsel %vm1271, %v2081, 0.0
        %v2112 = vsel %vm1272, %v2082, 0.0
        %v2113 = vsel %vm1273, %v2083, 0.0
        %v2114 = vsel %vm1274, %v2052, 0.0
        %v2115 = vsel %vm1275, %v2053, 0.0
        %v2116 = vadd.f32 %v1880, %v2084
        %v2117 = vadd.f32 %v1881, %v2085
        %v2118 = vadd.f32 %v1882, %v2086
        %v2119 = vadd.f32 %v1883, %v2087
        %v2120 = vadd.f32 %v1884, %v2088
        %v2121 = vadd.f32 %v1885, %v2089
        %v2122 = vadd.f32 %v1886, %v2090
        %v2123 = vadd.f32 %v1887, %v2091
        %v2124 = vadd.f32 %v1888, %v2092
        %v2125 = vadd.f32 %v1889, %v2093
        %v2126 = vadd.f32 %v1890, %v2094
        %v2127 = vadd.f32 %v1891, %v2095
        %v2128 = vadd.f32 %v1892, %v2096
        %v2129 = vadd.f32 %v1893, %v2097
        %v2130 = vadd.f32 %v1894, %v2098
        %v2131 = vadd.f32 %v1895, %v2099
        %v2132 = vadd.f32 %v1896, %v2100
        %v2133 = vadd.f32 %v1897, %v2101
        %v2134 = vadd.f32 %v1898, %v2102
        %v2135 = vadd.f32 %v1899, %v2103
        %v2136 = vadd.f32 %v1900, %v2104
        %v2137 = vadd.f32 %v1901, %v2105
        %v2138 = vadd.f32 %v1902, %v2106
        %v2139 = vadd.f32 %v1903, %v2107
        %v2140 = vadd.f32 %v1904, %v2108
        %v2141 = vadd.f32 %v1905, %v2109
        %v2142 = vadd.f32 %v1906, %v2110
        %v2143 = vadd.f32 %v1907, %v2111
        %v2144 = vadd.f32 %v1908, %v2112
        %v2145 = vadd.f32 %v1909, %v2113
        %v2146 = vadd.f32 %v1910, %v2114
        %v2147 = vadd.f32 %v1911, %v2115
        %v2148 = vlaneseq
        %v2149 = vshrl.u32 %v2148, 7
        %v2150 = vsub.s32 0, %v2149
        %v2151 = vrot.slane %v593, %v2150
        %v2152 = vmul.f32 %v2116, %v2151
        %v2153 = vmul.f32 %v2117, %v2151
        %v2154 = vmul.f32 %v2118, %v2151
        %v2155 = vmul.f32 %v2119, %v2151
        %v2156 = vmul.f32 %v2120, %v2151
        %v2157 = vmul.f32 %v2121, %v2151
        %v2158 = vmul.f32 %v2122, %v2151
        %v2159 = vmul.f32 %v2123, %v2151
        %v2160 = vmul.f32 %v2124, %v2151
        %v2161 = vmul.f32 %v2125, %v2151
        %v2162 = vmul.f32 %v2126, %v2151
        %v2163 = vmul.f32 %v2127, %v2151
        %v2164 = vmul.f32 %v2128, %v2151
        %v2165 = vmul.f32 %v2129, %v2151
        %v2166 = vmul.f32 %v2130, %v2151
        %v2167 = vmul.f32 %v2131, %v2151
        %v2168 = vmul.f32 %v2132, %v2151
        %v2169 = vmul.f32 %v2133, %v2151
        %v2170 = vmul.f32 %v2134, %v2151
        %v2171 = vmul.f32 %v2135, %v2151
        %v2172 = vmul.f32 %v2136, %v2151
        %v2173 = vmul.f32 %v2137, %v2151
        %v2174 = vmul.f32 %v2138, %v2151
        %v2175 = vmul.f32 %v2139, %v2151
        %v2176 = vmul.f32 %v2140, %v2151
        %v2177 = vmul.f32 %v2141, %v2151
        %v2178 = vmul.f32 %v2142, %v2151
        %v2179 = vmul.f32 %v2143, %v2151
        %v2180 = vmul.f32 %v2144, %v2151
        %v2181 = vmul.f32 %v2145, %v2151
        %v2182 = vmul.f32 %v2146, %v2151
        %v2183 = vmul.f32 %v2147, %v2151
        %v2184 = vlaneseq
        %v2185 = vshrl.u32 %v2184, 7
        %v2186 = vsub.s32 0, %v2185
        %v2187 = vrot.slane %v594, %v2186
        %v2188 = vadd.f32 %v2152, %v2187
        %v2189 = vadd.f32 %v2153, %v2187
        %v2190 = vadd.f32 %v2154, %v2187
        %v2191 = vadd.f32 %v2155, %v2187
        %v2192 = vadd.f32 %v2156, %v2187
        %v2193 = vadd.f32 %v2157, %v2187
        %v2194 = vadd.f32 %v2158, %v2187
        %v2195 = vadd.f32 %v2159, %v2187
        %v2196 = vadd.f32 %v2160, %v2187
        %v2197 = vadd.f32 %v2161, %v2187
        %v2198 = vadd.f32 %v2162, %v2187
        %v2199 = vadd.f32 %v2163, %v2187
        %v2200 = vadd.f32 %v2164, %v2187
        %v2201 = vadd.f32 %v2165, %v2187
        %v2202 = vadd.f32 %v2166, %v2187
        %v2203 = vadd.f32 %v2167, %v2187
        %v2204 = vadd.f32 %v2168, %v2187
        %v2205 = vadd.f32 %v2169, %v2187
        %v2206 = vadd.f32 %v2170, %v2187
        %v2207 = vadd.f32 %v2171, %v2187
        %v2208 = vadd.f32 %v2172, %v2187
        %v2209 = vadd.f32 %v2173, %v2187
        %v2210 = vadd.f32 %v2174, %v2187
        %v2211 = vadd.f32 %v2175, %v2187
        %v2212 = vadd.f32 %v2176, %v2187
        %v2213 = vadd.f32 %v2177, %v2187
        %v2214 = vadd.f32 %v2178, %v2187
        %v2215 = vadd.f32 %v2179, %v2187
        %v2216 = vadd.f32 %v2180, %v2187
        %v2217 = vadd.f32 %v2181, %v2187
        %v2218 = vadd.f32 %v2182, %v2187
        %v2219 = vadd.f32 %v2183, %v2187
        %v2220 = vmax.f32 %v2188, 0.0
        %v2221 = vmax.f32 %v2189, 0.0
        %v2222 = vmax.f32 %v2190, 0.0
        %v2223 = vmax.f32 %v2191, 0.0
        %v2224 = vmax.f32 %v2192, 0.0
        %v2225 = vmax.f32 %v2193, 0.0
        %v2226 = vmax.f32 %v2194, 0.0
        %v2227 = vmax.f32 %v2195, 0.0
        %v2228 = vmax.f32 %v2196, 0.0
        %v2229 = vmax.f32 %v2197, 0.0
        %v2230 = vmax.f32 %v2198, 0.0
        %v2231 = vmax.f32 %v2199, 0.0
        %v2232 = vmax.f32 %v2200, 0.0
        %v2233 = vmax.f32 %v2201, 0.0
        %v2234 = vmax.f32 %v2202, 0.0
        %v2235 = vmax.f32 %v2203, 0.0
        %v2236 = vmax.f32 %v2204, 0.0
        %v2237 = vmax.f32 %v2205, 0.0
        %v2238 = vmax.f32 %v2206, 0.0
        %v2239 = vmax.f32 %v2207, 0.0
        %v2240 = vmax.f32 %v2208, 0.0
        %v2241 = vmax.f32 %v2209, 0.0
        %v2242 = vmax.f32 %v2210, 0.0
        %v2243 = vmax.f32 %v2211, 0.0
        %v2244 = vmax.f32 %v2212, 0.0
        %v2245 = vmax.f32 %v2213, 0.0
        %v2246 = vmax.f32 %v2214, 0.0
        %v2247 = vmax.f32 %v2215, 0.0
        %v2248 = vmax.f32 %v2216, 0.0
        %v2249 = vmax.f32 %v2217, 0.0
        %v2250 = vmax.f32 %v2218, 0.0
        %v2251 = vmax.f32 %v2219, 0.0
        %v2252 = vmin.f32 %v2220, 6.0
        %v2253 = vmin.f32 %v2221, 6.0
        %v2254 = vmin.f32 %v2222, 6.0
        %v2255 = vmin.f32 %v2223, 6.0
        %v2256 = vmin.f32 %v2224, 6.0
        %v2257 = vmin.f32 %v2225, 6.0
        %v2258 = vmin.f32 %v2226, 6.0
        %v2259 = vmin.f32 %v2227, 6.0
        %v2260 = vmin.f32 %v2228, 6.0
        %v2261 = vmin.f32 %v2229, 6.0
        %v2262 = vmin.f32 %v2230, 6.0
        %v2263 = vmin.f32 %v2231, 6.0
        %v2264 = vmin.f32 %v2232, 6.0
        %v2265 = vmin.f32 %v2233, 6.0
        %v2266 = vmin.f32 %v2234, 6.0
        %v2267 = vmin.f32 %v2235, 6.0
        %v2268 = vmin.f32 %v2236, 6.0
        %v2269 = vmin.f32 %v2237, 6.0
        %v2270 = vmin.f32 %v2238, 6.0
        %v2271 = vmin.f32 %v2239, 6.0
        %v2272 = vmin.f32 %v2240, 6.0
        %v2273 = vmin.f32 %v2241, 6.0
        %v2274 = vmin.f32 %v2242, 6.0
        %v2275 = vmin.f32 %v2243, 6.0
        %v2276 = vmin.f32 %v2244, 6.0
        %v2277 = vmin.f32 %v2245, 6.0
        %v2278 = vmin.f32 %v2246, 6.0
        %v2279 = vmin.f32 %v2247, 6.0
        %v2280 = vmin.f32 %v2248, 6.0
        %v2281 = vmin.f32 %v2249, 6.0
        %v2282 = vmin.f32 %v2250, 6.0
        %v2283 = vmin.f32 %v2251, 6.0
        %v2284 = vpack.c.bf16 %v2253, %v2252
        %v2285 = vpack.c.bf16 %v2255, %v2254
        %v2286 = vpack.c.bf16 %v2257, %v2256
        %v2287 = vpack.c.bf16 %v2259, %v2258
        %v2288 = vpack.c.bf16 %v2261, %v2260
        %v2289 = vpack.c.bf16 %v2263, %v2262
        %v2290 = vpack.c.bf16 %v2265, %v2264
        %v2291 = vpack.c.bf16 %v2267, %v2266
        %v2292 = vpack.c.bf16 %v2269, %v2268
        %v2293 = vpack.c.bf16 %v2271, %v2270
        %v2294 = vpack.c.bf16 %v2273, %v2272
        %v2295 = vpack.c.bf16 %v2275, %v2274
        %v2296 = vpack.c.bf16 %v2277, %v2276
        %v2297 = vpack.c.bf16 %v2279, %v2278
        %v2298 = vpack.c.bf16 %v2281, %v2280
        %v2299 = vpack.c.bf16 %v2283, %v2282
        %v2300 = vld [vmem:[%s4] sm:$0xf]
        %v2301 = vld [vmem:[%s4 + $0x4] sm:$0xf]
        %v2302 = vld [vmem:[%s4 + $0x8] sm:$0xf]
        %v2303 = vld [vmem:[%s4 + $0xc] sm:$0xf]
        %v2308 = vunpack.c.l.b16 %v2300
        %v2309 = vunpack.c.l.b16 %v2301
        %v2310 = vunpack.c.l.b16 %v2302
        %v2311 = vunpack.c.l.b16 %v2303
        %v2312 = vpack.c.b16 %v2309, %v2308
        %v2313 = vpack.c.b16 %v2311, %v2310
        %vm2316 = vcmask 261120
        %v2318 = vsel %vm2316, %v2284, 0
        %v2321 = vsel %vm2316, %v2285, 0
        %v2324 = vsel %vm2316, %v2286, 0
        %v2327 = vsel %vm2316, %v2287, 0
        %v2330 = vsel %vm2316, %v2288, 0
        %v2333 = vsel %vm2316, %v2289, 0
        %v2336 = vsel %vm2316, %v2290, 0
        %v2339 = vsel %vm2316, %v2291, 0
        %v2342 = vsel %vm2316, %v2292, 0
        %v2345 = vsel %vm2316, %v2293, 0
        %v2348 = vsel %vm2316, %v2294, 0
        %v2351 = vsel %vm2316, %v2295, 0
        %v2354 = vsel %vm2316, %v2296, 0
        %v2357 = vsel %vm2316, %v2297, 0
        %v2360 = vsel %vm2316, %v2298, 0
        %v2363 = vsel %vm2316, %v2299, 0
        %2365 = vmatprep.subr.bf16.mxu0 0
        %2366 = vmatpush1.bf16.msra.mxu0 0
        %2367 = vmatprep.subr.bf16.mxu0 0
        %2368 = vmatpush1.bf16.msra.mxu0 0
        %2369 = vmatprep.subr.bf16.mxu0 0
        %2370 = vmatpush1.bf16.msra.mxu0 0
        %2371 = vmatprep.subr.bf16.mxu0 0
        %2372 = vmatpush1.bf16.msra.mxu0 0
        %2373 = vmatprep.subr.bf16.mxu0 0
        %2374 = vmatpush1.bf16.msra.mxu0 0
        %2375 = vmatprep.subr.bf16.mxu0 0
        %2376 = vmatpush1.bf16.msra.mxu0 0
        %2377 = vmatprep.subr.bf16.mxu0 0
        %2378 = vmatpush1.bf16.msra.mxu0 %v2313
        %2379 = vmatprep.subr.bf16.mxu0 0
        %2380 = vmatpush1.bf16.msra.mxu0 %v2312
        %2381 = vmatprep.subr.bf16.mxu0 0
        %2382 = vmatpush2.bf16.msra.mxu0 0
        %2383 = vmatprep.subr.bf16.mxu0 0
        %2384 = vmatpush2.bf16.msra.mxu0 0
        %2385 = vmatprep.subr.bf16.mxu0 0
        %2386 = vmatpush2.bf16.msra.mxu0 0
        %2387 = vmatprep.subr.bf16.mxu0 0
        %2388 = vmatpush2.bf16.msra.mxu0 0
        %2389 = vmatprep.subr.bf16.mxu0 0
        %2390 = vmatpush2.bf16.msra.mxu0 0
        %2391 = vmatprep.subr.bf16.mxu0 0
        %2392 = vmatpush2.bf16.msra.mxu0 0
        %2393 = vmatprep.subr.bf16.mxu0 0
        %2394 = vmatpush2.bf16.msra.mxu0 0
        %2395 = vmatprep.subr.bf16.mxu0 0
        %2396 = vmatpush2.bf16.msra.mxu0 0
        %2397 = vmatprep.mubr.bf16.mxu0 0
        %2398 = vmatmul.mubr.bf16.gmra.mxu0 %v2318
        %v2399 = vpop.f32.mrf.mxu0
        %v2400 = vadd.f32 0.0, %v2399
        %v2401 = vpop.f32.mrf.mxu0
        %v2402 = vpop.f32.mrf.mxu0
        %v2403 = vadd.f32 0.0, %v2402
        %v2404 = vpop.f32.mrf.mxu0
        %2405 = vmatprep.mubr.bf16.mxu0 0
        %2406 = vmatmul.mubr.bf16.gmra.mxu0 %v2321
        %v2407 = vpop.f32.mrf.mxu0
        %v2408 = vadd.f32 0.0, %v2407
        %v2409 = vpop.f32.mrf.mxu0
        %v2410 = vpop.f32.mrf.mxu0
        %v2411 = vadd.f32 0.0, %v2410
        %v2412 = vpop.f32.mrf.mxu0
        %2413 = vmatprep.mubr.bf16.mxu0 0
        %2414 = vmatmul.mubr.bf16.gmra.mxu0 %v2324
        %v2415 = vpop.f32.mrf.mxu0
        %v2416 = vadd.f32 0.0, %v2415
        %v2417 = vpop.f32.mrf.mxu0
        %v2418 = vpop.f32.mrf.mxu0
        %v2419 = vadd.f32 0.0, %v2418
        %v2420 = vpop.f32.mrf.mxu0
        %2421 = vmatprep.mubr.bf16.mxu0 0
        %2422 = vmatmul.mubr.bf16.gmra.mxu0 %v2327
        %v2423 = vpop.f32.mrf.mxu0
        %v2424 = vadd.f32 0.0, %v2423
        %v2425 = vpop.f32.mrf.mxu0
        %v2426 = vpop.f32.mrf.mxu0
        %v2427 = vadd.f32 0.0, %v2426
        %v2428 = vpop.f32.mrf.mxu0
        %2429 = vmatprep.mubr.bf16.mxu0 0
        %2430 = vmatmul.mubr.bf16.gmra.mxu0 %v2330
        %v2431 = vpop.f32.mrf.mxu0
        %v2432 = vadd.f32 0.0, %v2431
        %v2433 = vpop.f32.mrf.mxu0
        %v2434 = vpop.f32.mrf.mxu0
        %v2435 = vadd.f32 0.0, %v2434
        %v2436 = vpop.f32.mrf.mxu0
        %2437 = vmatprep.mubr.bf16.mxu0 0
        %2438 = vmatmul.mubr.bf16.gmra.mxu0 %v2333
        %v2439 = vpop.f32.mrf.mxu0
        %v2440 = vadd.f32 0.0, %v2439
        %v2441 = vpop.f32.mrf.mxu0
        %v2442 = vpop.f32.mrf.mxu0
        %v2443 = vadd.f32 0.0, %v2442
        %v2444 = vpop.f32.mrf.mxu0
        %2445 = vmatprep.mubr.bf16.mxu0 0
        %2446 = vmatmul.mubr.bf16.gmra.mxu0 %v2336
        %v2447 = vpop.f32.mrf.mxu0
        %v2448 = vadd.f32 0.0, %v2447
        %v2449 = vpop.f32.mrf.mxu0
        %v2450 = vpop.f32.mrf.mxu0
        %v2451 = vadd.f32 0.0, %v2450
        %v2452 = vpop.f32.mrf.mxu0
        %2453 = vmatprep.mubr.bf16.mxu0 0
        %2454 = vmatmul.mubr.bf16.gmra.mxu0 %v2339
        %v2455 = vpop.f32.mrf.mxu0
        %v2456 = vadd.f32 0.0, %v2455
        %v2457 = vpop.f32.mrf.mxu0
        %v2458 = vpop.f32.mrf.mxu0
        %v2459 = vadd.f32 0.0, %v2458
        %v2460 = vpop.f32.mrf.mxu0
        %2461 = vmatprep.mubr.bf16.mxu0 0
        %2462 = vmatmul.mubr.bf16.gmra.mxu0 %v2342
        %v2463 = vpop.f32.mrf.mxu0
        %v2464 = vadd.f32 0.0, %v2463
        %v2465 = vpop.f32.mrf.mxu0
        %v2466 = vpop.f32.mrf.mxu0
        %v2467 = vadd.f32 0.0, %v2466
        %v2468 = vpop.f32.mrf.mxu0
        %2469 = vmatprep.mubr.bf16.mxu0 0
        %2470 = vmatmul.mubr.bf16.gmra.mxu0 %v2345
        %v2471 = vpop.f32.mrf.mxu0
        %v2472 = vadd.f32 0.0, %v2471
        %v2473 = vpop.f32.mrf.mxu0
        %v2474 = vpop.f32.mrf.mxu0
        %v2475 = vadd.f32 0.0, %v2474
        %v2476 = vpop.f32.mrf.mxu0
        %2477 = vmatprep.mubr.bf16.mxu0 0
        %2478 = vmatmul.mubr.bf16.gmra.mxu0 %v2348
        %v2479 = vpop.f32.mrf.mxu0
        %v2480 = vadd.f32 0.0, %v2479
        %v2481 = vpop.f32.mrf.mxu0
        %v2482 = vpop.f32.mrf.mxu0
        %v2483 = vadd.f32 0.0, %v2482
        %v2484 = vpop.f32.mrf.mxu0
        %2485 = vmatprep.mubr.bf16.mxu0 0
        %2486 = vmatmul.mubr.bf16.gmra.mxu0 %v2351
        %v2487 = vpop.f32.mrf.mxu0
        %v2488 = vadd.f32 0.0, %v2487
        %v2489 = vpop.f32.mrf.mxu0
        %v2490 = vpop.f32.mrf.mxu0
        %v2491 = vadd.f32 0.0, %v2490
        %v2492 = vpop.f32.mrf.mxu0
        %2493 = vmatprep.mubr.bf16.mxu0 0
        %2494 = vmatmul.mubr.bf16.gmra.mxu0 %v2354
        %v2495 = vpop.f32.mrf.mxu0
        %v2496 = vadd.f32 0.0, %v2495
        %v2497 = vpop.f32.mrf.mxu0
        %v2498 = vpop.f32.mrf.mxu0
        %v2499 = vadd.f32 0.0, %v2498
        %v2500 = vpop.f32.mrf.mxu0
        %2501 = vmatprep.mubr.bf16.mxu0 0
        %2502 = vmatmul.mubr.bf16.gmra.mxu0 %v2357
        %v2503 = vpop.f32.mrf.mxu0
        %v2504 = vadd.f32 0.0, %v2503
        %v2505 = vpop.f32.mrf.mxu0
        %v2506 = vpop.f32.mrf.mxu0
        %v2507 = vadd.f32 0.0, %v2506
        %v2508 = vpop.f32.mrf.mxu0
        %2509 = vmatprep.mubr.bf16.mxu0 0
        %2510 = vmatmul.mubr.bf16.gmra.mxu0 %v2360
        %v2511 = vpop.f32.mrf.mxu0
        %v2512 = vadd.f32 0.0, %v2511
        %v2513 = vpop.f32.mrf.mxu0
        %v2514 = vpop.f32.mrf.mxu0
        %v2515 = vadd.f32 0.0, %v2514
        %v2516 = vpop.f32.mrf.mxu0
        %2517 = vmatprep.mubr.bf16.mxu0 0
        %2518 = vmatmul.mubr.bf16.gmra.mxu0 %v2363
        %v2519 = vpop.f32.mrf.mxu0
        %v2520 = vadd.f32 0.0, %v2519
        %v2521 = vpop.f32.mrf.mxu0
        %v2522 = vpop.f32.mrf.mxu0
        %v2523 = vadd.f32 0.0, %v2522
        %v2524 = vpop.f32.mrf.mxu0
        %2525 = vdwg.mxu0
        %v2526 = vld [vmem:[#allocation5] sm:$0x1]
        %v2527 = vlaneseq
        %v2528 = vshrl.u32 %v2527, 7
        %v2529 = vsub.s32 0, %v2528
        %v2530 = vrot.slane %v2526, %v2529
        %v2531 = vmul.f32 %v2400, %v2530
        %v2532 = vmul.f32 %v2403, %v2530
        %v2533 = vmul.f32 %v2408, %v2530
        %v2534 = vmul.f32 %v2411, %v2530
        %v2535 = vmul.f32 %v2416, %v2530
        %v2536 = vmul.f32 %v2419, %v2530
        %v2537 = vmul.f32 %v2424, %v2530
        %v2538 = vmul.f32 %v2427, %v2530
        %v2539 = vmul.f32 %v2432, %v2530
        %v2540 = vmul.f32 %v2435, %v2530
        %v2541 = vmul.f32 %v2440, %v2530
        %v2542 = vmul.f32 %v2443, %v2530
        %v2543 = vmul.f32 %v2448, %v2530
        %v2544 = vmul.f32 %v2451, %v2530
        %v2545 = vmul.f32 %v2456, %v2530
        %v2546 = vmul.f32 %v2459, %v2530
        %v2547 = vmul.f32 %v2464, %v2530
        %v2548 = vmul.f32 %v2467, %v2530
        %v2549 = vmul.f32 %v2472, %v2530
        %v2550 = vmul.f32 %v2475, %v2530
        %v2551 = vmul.f32 %v2480, %v2530
        %v2552 = vmul.f32 %v2483, %v2530
        %v2553 = vmul.f32 %v2488, %v2530
        %v2554 = vmul.f32 %v2491, %v2530
        %v2555 = vmul.f32 %v2496, %v2530
        %v2556 = vmul.f32 %v2499, %v2530
        %v2557 = vmul.f32 %v2504, %v2530
        %v2558 = vmul.f32 %v2507, %v2530
        %v2559 = vmul.f32 %v2512, %v2530
        %v2560 = vmul.f32 %v2515, %v2530
        %v2561 = vmul.f32 %v2520, %v2530
        %v2562 = vmul.f32 %v2523, %v2530
        %v2563 = vld [vmem:[#allocation5 + $0x1] sm:$0x1]
        %v2564 = vlaneseq
        %v2565 = vshrl.u32 %v2564, 7
        %v2566 = vsub.s32 0, %v2565
        %v2567 = vrot.slane %v2563, %v2566
        %v2568 = vadd.f32 %v2531, %v2567
        %v2569 = vadd.f32 %v2532, %v2567
        %v2570 = vadd.f32 %v2533, %v2567
        %v2571 = vadd.f32 %v2534, %v2567
        %v2572 = vadd.f32 %v2535, %v2567
        %v2573 = vadd.f32 %v2536, %v2567
        %v2574 = vadd.f32 %v2537, %v2567
        %v2575 = vadd.f32 %v2538, %v2567
        %v2576 = vadd.f32 %v2539, %v2567
        %v2577 = vadd.f32 %v2540, %v2567
        %v2578 = vadd.f32 %v2541, %v2567
        %v2579 = vadd.f32 %v2542, %v2567
        %v2580 = vadd.f32 %v2543, %v2567
        %v2581 = vadd.f32 %v2544, %v2567
        %v2582 = vadd.f32 %v2545, %v2567
        %v2583 = vadd.f32 %v2546, %v2567
        %v2584 = vadd.f32 %v2547, %v2567
        %v2585 = vadd.f32 %v2548, %v2567
        %v2586 = vadd.f32 %v2549, %v2567
        %v2587 = vadd.f32 %v2550, %v2567
        %v2588 = vadd.f32 %v2551, %v2567
        %v2589 = vadd.f32 %v2552, %v2567
        %v2590 = vadd.f32 %v2553, %v2567
        %v2591 = vadd.f32 %v2554, %v2567
        %v2592 = vadd.f32 %v2555, %v2567
        %v2593 = vadd.f32 %v2556, %v2567
        %v2594 = vadd.f32 %v2557, %v2567
        %v2595 = vadd.f32 %v2558, %v2567
        %v2596 = vadd.f32 %v2559, %v2567
        %v2597 = vadd.f32 %v2560, %v2567
        %v2598 = vadd.f32 %v2561, %v2567
        %v2599 = vadd.f32 %v2562, %v2567
        %v2600 = vsel %vm381, %v2568, 0.0
        %v2601 = vsel %vm381, %v2569, 0.0
        %v2602 = vadd.f32 %v2600, %v2601
        %v2603 = vsel %vm381, %v2570, 0.0
        %v2604 = vadd.f32 %v2602, %v2603
        %v2605 = vsel %vm381, %v2571, 0.0
        %v2606 = vadd.f32 %v2604, %v2605
        %v2607 = vsel %vm381, %v2572, 0.0
        %v2608 = vadd.f32 %v2606, %v2607
        %v2609 = vsel %vm381, %v2573, 0.0
        %v2610 = vadd.f32 %v2608, %v2609
        %v2611 = vsel %vm381, %v2574, 0.0
        %v2612 = vadd.f32 %v2610, %v2611
        %v2613 = vsel %vm381, %v2575, 0.0
        %v2614 = vadd.f32 %v2612, %v2613
        %v2615 = vsel %vm381, %v2576, 0.0
        %v2616 = vadd.f32 %v2614, %v2615
        %v2617 = vsel %vm381, %v2577, 0.0
        %v2618 = vadd.f32 %v2616, %v2617
        %v2619 = vsel %vm381, %v2578, 0.0
        %v2620 = vadd.f32 %v2618, %v2619
        %v2621 = vsel %vm381, %v2579, 0.0
        %v2622 = vadd.f32 %v2620, %v2621
        %v2623 = vsel %vm381, %v2580, 0.0
        %v2624 = vadd.f32 %v2622, %v2623
        %v2625 = vsel %vm381, %v2581, 0.0
        %v2626 = vadd.f32 %v2624, %v2625
        %v2627 = vsel %vm381, %v2582, 0.0
        %v2628 = vadd.f32 %v2626, %v2627
        %v2629 = vsel %vm381, %v2583, 0.0
        %v2630 = vadd.f32 %v2628, %v2629
        %v2631 = vsel %vm381, %v2584, 0.0
        %v2632 = vadd.f32 %v2630, %v2631
        %v2633 = vsel %vm381, %v2585, 0.0
        %v2634 = vadd.f32 %v2632, %v2633
        %v2635 = vsel %vm381, %v2586, 0.0
        %v2636 = vadd.f32 %v2634, %v2635
        %v2637 = vsel %vm381, %v2587, 0.0
        %v2638 = vadd.f32 %v2636, %v2637
        %v2639 = vsel %vm381, %v2588, 0.0
        %v2640 = vadd.f32 %v2638, %v2639
        %v2641 = vsel %vm381, %v2589, 0.0
        %v2642 = vadd.f32 %v2640, %v2641
        %v2643 = vsel %vm381, %v2590, 0.0
        %v2644 = vadd.f32 %v2642, %v2643
        %v2645 = vsel %vm381, %v2591, 0.0
        %v2646 = vadd.f32 %v2644, %v2645
        %v2647 = vsel %vm381, %v2592, 0.0
        %v2648 = vadd.f32 %v2646, %v2647
        %v2649 = vsel %vm381, %v2593, 0.0
        %v2650 = vadd.f32 %v2648, %v2649
        %v2651 = vsel %vm381, %v2594, 0.0
        %v2652 = vadd.f32 %v2650, %v2651
        %v2653 = vsel %vm381, %v2595, 0.0
        %v2654 = vadd.f32 %v2652, %v2653
        %v2655 = vsel %vm381, %v2596, 0.0
        %v2656 = vadd.f32 %v2654, %v2655
        %v2657 = vsel %vm381, %v2597, 0.0
        %v2658 = vadd.f32 %v2656, %v2657
        %v2659 = vsel %vm381, %v2598, 0.0
        %v2660 = vadd.f32 %v2658, %v2659
        %v2661 = vsel %vm381, %v2599, 0.0
        %v2662 = vadd.f32 %v2660, %v2661
        %v2663 = vrot.slane %v2662, 4
        %v2664 = vadd.f32 %v2662, %v2663
        %v2665 = vrot.slane %v2664, 2
        %v2666 = vadd.f32 %v2664, %v2665
        %v2667 = vrot.slane %v2666, 1
        %v2668 = vadd.f32 %v2666, %v2667
        %v2669 = vmul.f32 %v2668, 0.00390625
        %v2670 = vld [vmem:[#allocation7] sm:$0xff]
        %v2671 = vld [vmem:[#allocation7 + $0x8] sm:$0xff]
        %v2673 = vsel %vm381, %v2669, 0
        %2675 = vmatprep.subr.mxu0 0.0
        %2676 = vmatpush1.msra.mxu0 0.0
        %2677 = vmatprep.subr.mxu0 0.0
        %2678 = vmatpush1.msra.mxu0 0.0
        %2679 = vmatprep.subr.mxu0 0.0
        %2680 = vmatpush1.msra.mxu0 0.0
        %2681 = vmatprep.subr.mxu0 0.0
        %2682 = vmatpush1.msra.mxu0 0.0
        %2683 = vmatprep.subr.mxu0 0.0
        %2684 = vmatpush1.msra.mxu0 0.0
        %2685 = vmatprep.subr.mxu0 0.0
        %2686 = vmatpush1.msra.mxu0 0.0
        %2687 = vmatprep.subr.mxu0 0.0
        %2688 = vmatpush1.msra.mxu0 0.0
        %2689 = vmatprep.subr.mxu0 0.0
        %2690 = vmatpush1.msra.mxu0 0.0
        %2691 = vmatprep.subr.mxu0 0.0
        %2692 = vmatpush1.msra.mxu0 0.0
        %2693 = vmatprep.subr.mxu0 0.0
        %2694 = vmatpush1.msra.mxu0 0.0
        %2695 = vmatprep.subr.mxu0 0.0
        %2696 = vmatpush1.msra.mxu0 0.0
        %2697 = vmatprep.subr.mxu0 0.0
        %2698 = vmatpush1.msra.mxu0 0.0
        %2699 = vmatprep.subr.mxu0 0.0
        %2700 = vmatpush1.msra.mxu0 0.0
        %2701 = vmatprep.subr.mxu0 0.0
        %2702 = vmatpush1.msra.mxu0 0.0
        %2703 = vmatprep.subr.mxu0 0.0
        %2704 = vmatpush1.msra.mxu0 %v2671
        %2705 = vmatprep.subr.mxu0 0.0
        %2706 = vmatpush1.msra.mxu0 %v2670
        %2707 = vmatprep.subr.mxu0 0.0
        %2708 = vmatpush2.msra.mxu0 0.0
        %2709 = vmatprep.subr.mxu0 0.0
        %2710 = vmatpush2.msra.mxu0 0.0
        %2711 = vmatprep.subr.mxu0 0.0
        %2712 = vmatpush2.msra.mxu0 0.0
        %2713 = vmatprep.subr.mxu0 0.0
        %2714 = vmatpush2.msra.mxu0 0.0
        %2715 = vmatprep.subr.mxu0 0.0
        %2716 = vmatpush2.msra.mxu0 0.0
        %2717 = vmatprep.subr.mxu0 0.0
        %2718 = vmatpush2.msra.mxu0 0.0
        %2719 = vmatprep.subr.mxu0 0.0
        %2720 = vmatpush2.msra.mxu0 0.0
        %2721 = vmatprep.subr.mxu0 0.0
        %2722 = vmatpush2.msra.mxu0 0.0
        %2723 = vmatprep.subr.mxu0 0.0
        %2724 = vmatpush2.msra.mxu0 0.0
        %2725 = vmatprep.subr.mxu0 0.0
        %2726 = vmatpush2.msra.mxu0 0.0
        %2727 = vmatprep.subr.mxu0 0.0
        %2728 = vmatpush2.msra.mxu0 0.0
        %2729 = vmatprep.subr.mxu0 0.0
        %2730 = vmatpush2.msra.mxu0 0.0
        %2731 = vmatprep.subr.mxu0 0.0
        %2732 = vmatpush2.msra.mxu0 0.0
        %2733 = vmatprep.subr.mxu0 0.0
        %2734 = vmatpush2.msra.mxu0 0.0
        %2735 = vmatprep.subr.mxu0 0.0
        %2736 = vmatpush2.msra.mxu0 0.0
        %2737 = vmatprep.subr.mxu0 0.0
        %2738 = vmatpush2.msra.mxu0 0.0
        %2739 = vmatprep.mubr.f32.mxu0 0.0
        %2740 = vmatmul.mubr.f32.gmra.mxu0 %v2673
        %v2741 = vpop.f32.mrf.mxu0
        %v2742 = vadd.f32 0.0, %v2741
        %v2743 = vpop.f32.mrf.mxu0
        %2744 = vdwg.mxu0
        %v2745 = vxor.u32 %v2742, 2147483648
        %v2746 = vmul.f32 %v2745, 1.442695
        %v2747 = vpow.pop %v2746
        %v2748 = vadd.f32 %v2747, 1.0
        %v2749 = vrcp.pop %v2748
        %v2750 = vmul.f32 1.0, %v2749
        %v2751 = vlaneseq
        %v2752 = vshrl.u32 %v2751, 7
        %v2753 = vsub.s32 0, %v2752
        %v2754 = vrot.slane %v2750, %v2753
        %v2755 = vmul.f32 %v2568, %v2754
        %v2756 = vmul.f32 %v2569, %v2754
        %v2757 = vmul.f32 %v2570, %v2754
        %v2758 = vmul.f32 %v2571, %v2754
        %v2759 = vmul.f32 %v2572, %v2754
        %v2760 = vmul.f32 %v2573, %v2754
        %v2761 = vmul.f32 %v2574, %v2754
        %v2762 = vmul.f32 %v2575, %v2754
        %v2763 = vmul.f32 %v2576, %v2754
        %v2764 = vmul.f32 %v2577, %v2754
        %v2765 = vmul.f32 %v2578, %v2754
        %v2766 = vmul.f32 %v2579, %v2754
        %v2767 = vmul.f32 %v2580, %v2754
        %v2768 = vmul.f32 %v2581, %v2754
        %v2769 = vmul.f32 %v2582, %v2754
        %v2770 = vmul.f32 %v2583, %v2754
        %v2771 = vmul.f32 %v2584, %v2754
        %v2772 = vmul.f32 %v2585, %v2754
        %v2773 = vmul.f32 %v2586, %v2754
        %v2774 = vmul.f32 %v2587, %v2754
        %v2775 = vmul.f32 %v2588, %v2754
        %v2776 = vmul.f32 %v2589, %v2754
        %v2777 = vmul.f32 %v2590, %v2754
        %v2778 = vmul.f32 %v2591, %v2754
        %v2779 = vmul.f32 %v2592, %v2754
        %v2780 = vmul.f32 %v2593, %v2754
        %v2781 = vmul.f32 %v2594, %v2754
        %v2782 = vmul.f32 %v2595, %v2754
        %v2783 = vmul.f32 %v2596, %v2754
        %v2784 = vmul.f32 %v2597, %v2754
        %v2785 = vmul.f32 %v2598, %v2754
        %v2786 = vmul.f32 %v2599, %v2754
        %v2787 = vadd.f32 %v2755, %v325
        %v2788 = vadd.f32 %v2756, %v326
        %v2789 = vadd.f32 %v2757, %v327
        %v2790 = vadd.f32 %v2758, %v328
        %v2791 = vadd.f32 %v2759, %v329
        %v2792 = vadd.f32 %v2760, %v330
        %v2793 = vadd.f32 %v2761, %v331
        %v2794 = vadd.f32 %v2762, %v332
        %v2795 = vadd.f32 %v2763, %v333
        %v2796 = vadd.f32 %v2764, %v334
        %v2797 = vadd.f32 %v2765, %v335
        %v2798 = vadd.f32 %v2766, %v336
        %v2799 = vadd.f32 %v2767, %v337
        %v2800 = vadd.f32 %v2768, %v338
        %v2801 = vadd.f32 %v2769, %v339
        %v2802 = vadd.f32 %v2770, %v340
        %v2803 = vadd.f32 %v2771, %v341
        %v2804 = vadd.f32 %v2772, %v342
        %v2805 = vadd.f32 %v2773, %v343
        %v2806 = vadd.f32 %v2774, %v344
        %v2807 = vadd.f32 %v2775, %v345
        %v2808 = vadd.f32 %v2776, %v346
        %v2809 = vadd.f32 %v2777, %v347
        %v2810 = vadd.f32 %v2778, %v348
        %v2811 = vadd.f32 %v2779, %v349
        %v2812 = vadd.f32 %v2780, %v350
        %v2813 = vadd.f32 %v2781, %v351
        %v2814 = vadd.f32 %v2782, %v352
        %v2815 = vadd.f32 %v2783, %v353
        %v2816 = vadd.f32 %v2784, %v354
        %v2817 = vadd.f32 %v2785, %v355
        %v2818 = vadd.f32 %v2786, %v356
        %2819 = vst.msk [vmem:[%s323] sm:$0xff] %vm381, %v2787
        %2820 = vst.msk [vmem:[%s323 + $0x8] sm:$0xff] %vm381, %v2788
        %2821 = vst.msk [vmem:[%s323 + $0x10] sm:$0xff] %vm381, %v2789
        %2822 = vst.msk [vmem:[%s323 + $0x18] sm:$0xff] %vm381, %v2790
        %2823 = vst.msk [vmem:[%s323 + $0x20] sm:$0xff] %vm381, %v2791
        %2824 = vst.msk [vmem:[%s323 + $0x28] sm:$0xff] %vm381, %v2792
        %2825 = vst.msk [vmem:[%s323 + $0x30] sm:$0xff] %vm381, %v2793
        %2826 = vst.msk [vmem:[%s323 + $0x38] sm:$0xff] %vm381, %v2794
        %2827 = vst.msk [vmem:[%s323 + $0x40] sm:$0xff] %vm381, %v2795
        %2828 = vst.msk [vmem:[%s323 + $0x48] sm:$0xff] %vm381, %v2796
        %2829 = vst.msk [vmem:[%s323 + $0x50] sm:$0xff] %vm381, %v2797
        %2830 = vst.msk [vmem:[%s323 + $0x58] sm:$0xff] %vm381, %v2798
        %2831 = vst.msk [vmem:[%s323 + $0x60] sm:$0xff] %vm381, %v2799
        %2832 = vst.msk [vmem:[%s323 + $0x68] sm:$0xff] %vm381, %v2800
        %2833 = vst.msk [vmem:[%s323 + $0x70] sm:$0xff] %vm381, %v2801
        %2834 = vst.msk [vmem:[%s323 + $0x78] sm:$0xff] %vm381, %v2802
        %2835 = vst.msk [vmem:[%s323 + $0x80] sm:$0xff] %vm381, %v2803
        %2836 = vst.msk [vmem:[%s323 + $0x88] sm:$0xff] %vm381, %v2804
        %2837 = vst.msk [vmem:[%s323 + $0x90] sm:$0xff] %vm381, %v2805
        %2838 = vst.msk [vmem:[%s323 + $0x98] sm:$0xff] %vm381, %v2806
        %2839 = vst.msk [vmem:[%s323 + $0xa0] sm:$0xff] %vm381, %v2807
        %2840 = vst.msk [vmem:[%s323 + $0xa8] sm:$0xff] %vm381, %v2808
        %2841 = vst.msk [vmem:[%s323 + $0xb0] sm:$0xff] %vm381, %v2809
        %2842 = vst.msk [vmem:[%s323 + $0xb8] sm:$0xff] %vm381, %v2810
        %2843 = vst.msk [vmem:[%s323 + $0xc0] sm:$0xff] %vm381, %v2811
        %2844 = vst.msk [vmem:[%s323 + $0xc8] sm:$0xff] %vm381, %v2812
        %2845 = vst.msk [vmem:[%s323 + $0xd0] sm:$0xff] %vm381, %v2813
        %2846 = vst.msk [vmem:[%s323 + $0xd8] sm:$0xff] %vm381, %v2814
        %2847 = vst.msk [vmem:[%s323 + $0xe0] sm:$0xff] %vm381, %v2815
        %2848 = vst.msk [vmem:[%s323 + $0xe8] sm:$0xff] %vm381, %v2816
        %2849 = vst.msk [vmem:[%s323 + $0xf0] sm:$0xff] %vm381, %v2817
        %2850 = vst.msk [vmem:[%s323 + $0xf8] sm:$0xff] %vm381, %v2818
        %s2851 = sand.u32 %s185, 1
        %s2852 = scalar_lea.sflag [#allocation4], %s2851
        %s2853 = sand.u32 %s185, 1
        %s2854 = smul.addr %s2853, 256
        %s2855 = scalar_lea.vmem [#allocation8], %s2854
        // Predicated region
        $region61: #{eca_inverted_residual_v2.1} parent=47 // pred_check
          %p2856 = pneg %p195
        $region62: #{eca_inverted_residual_v2.1} parent=47 // pred_check_branch
          %2858 = sbr.rel (%p2856) target = $region64
        $region63: #{eca_inverted_residual_v2.1} parent=47 // pred_region
          %s2860 = ssub.s32 4096, 4096
          %2861 = vsyncadd %s2852, %s2860
          %s2862 = smul.addr %s25, 32
          %s2863 = smul.addr %s2862, 128
          %s2864 = scalar_lea.hbm %s7, %s2863
          %s2865 = sshll.u32 %s2855, 4
          %s2866 = int_to_ptr.vmem [resolvable:$true] %s2865
          %2871 = dma.vmem_to_hbm [thread:$0]  %s2866, 4096, %s2864, %s2852, 128, 128, 8
        $region64: #{eca_inverted_residual_v2.1} parent=47 // pred_fallthru
          _
      $region48: #{eca_inverted_residual_v2.1} parent=5 // pred_fallthru
        _
      %p2872 = scmp.le.s32.totalorder 2, %s20
      // Predicated region
      $region65: #{eca_inverted_residual_v2.1} parent=5 // pred_check
        %p2873 = pneg %p2872
      $region66: #{eca_inverted_residual_v2.1} parent=5 // pred_check_branch
        %2875 = sbr.rel (%p2873) target = $region68
      $region67: #{eca_inverted_residual_v2.1} parent=5 // pred_region
        %s2876 = ssub.s32 %s20, 2
        // Predicated region
        $region69: #{eca_inverted_residual_v2.1} parent=67 // pred_check
          %p2877 = pneg %p201
        $region70: #{eca_inverted_residual_v2.1} parent=67 // pred_check_branch
          %2879 = sbr.rel (%p2877) target = $region72
        $region71: #{eca_inverted_residual_v2.1} parent=67 // pred_region
          %s2880 = sand.u32 %s186, 1
          %s2881 = scalar_lea.sflag [#allocation4], %s2880
          %s2882 = sand.u32 %s186, 1
          %s2883 = smul.addr %s2882, 256
          %s2884 = scalar_lea.vmem [#allocation8], %s2883
          %2885 = dma.done %s2881, 4096
        $region72: #{eca_inverted_residual_v2.1} parent=67 // pred_fallthru
          _
      $region68: #{eca_inverted_residual_v2.1} parent=5 // pred_fallthru
        _
    $region6: #{eca_inverted_residual_v2.1} parent=1 // loop_footer
      %s24 = sadd.s32 1, %s20
    $region7: #{eca_inverted_residual_v2.1} parent=1 // loop_footer_branch
      %19 = sbr.rel target = $region3
    $region8: #{eca_inverted_residual_v2.1} parent=1 // loop_exit
      _
    %2886 = vsyncpa [#allocation3], 1
    %s2887 = scalar_lea.sflag [#allocation3], 1
    %2888 = vsyncpa %s2887, 1
    %2889 = vsyncpa [#allocation6], 1
    %2890 = vsyncpa [#allocation4], 1
    %s2891 = scalar_lea.sflag [#allocation4], 1
    %2892 = vsyncpa %s2891, 1

</llo_original>
